<compile_context>
chip_gen: v7x
topology: tpu7x:2x2x1
jax: 0.10.0
libtpu: 0.0.40
codegen_flags: <defaults>
</compile_context>

<pallas_src>
import functools
import math

import jax
import jax.numpy as jnp
from jax.experimental import pallas as pl
from jax.experimental.pallas import tpu as pltpu


def _layernorm(x, gamma, beta, eps=1e-5):
    # Centered two-pass variance: avoids the catastrophic-cancellation risk of
    # E[x^2] - mu^2 (LayerNorm is a tiny share of the kernel's work anyway).
    mu = jnp.mean(x, axis=-1, keepdims=True)
    xc = x - mu
    var = jnp.mean(xc * xc, axis=-1, keepdims=True)
    return xc * jax.lax.rsqrt(var + eps) * gamma + beta


def swin_block_kernel(x_ref,
                      wq_ref, wk_ref, wv_ref, bq_ref, bv_ref,
                      ow_ref, ob_ref,
                      g1_ref, be1_ref,
                      w1_ref, b1_ref, w2_ref, b2_ref,
                      g2_ref, be2_ref,
                      o_ref, *, num_heads):
    blk_b, L, C = x_ref.shape
    nh = num_heads
    hd = C // nh
    n_tok = blk_b * L

    # Token-major, lane-dense (C on lanes) layout straight from the BlockSpec:
    # no in-kernel transposes needed anywhere.
    x = x_ref[...].reshape(n_tok, C).astype(jnp.float32)
    x_bf = x.astype(jnp.bfloat16)

    # ---- fused Q/K/V projections: three full-width (n_tok,C)@(C,C) MXU dots,
    # bf16 operands, f32 accumulation.  Softmax scale 1/sqrt(hd) is folded into
    # wq/bq host-side.  The key bias is dropped: a constant shift on K adds a
    # per-query constant to every score in a row and cancels exactly in softmax.
    q = jnp.dot(x_bf, wq_ref[...], preferred_element_type=jnp.float32) + bq_ref[...]
    k = jnp.dot(x_bf, wk_ref[...], preferred_element_type=jnp.float32)
    v = jnp.dot(x_bf, wv_ref[...], preferred_element_type=jnp.float32) + bv_ref[...]
    q_bf = q.astype(jnp.bfloat16)
    k_bf = k.astype(jnp.bfloat16)
    v_bf = v.astype(jnp.bfloat16)

    # ---- attention scores.  The hd-deep score/context matmuls are inherently
    # per-head (the MXU has no batch mode), so a short static unroll is fine;
    # switch to lax.fori_loop(unroll=True) if nh grows past ~4.
    s_heads = []
    for h in range(nh):
        qh = q_bf[:, h * hd:(h + 1) * hd].reshape(blk_b, L, hd)
        kh = k_bf[:, h * hd:(h + 1) * hd].reshape(blk_b, L, hd)
        s_heads.append(jnp.einsum('bld,bmd->blm', qh, kh,
                                  preferred_element_type=jnp.float32))
    # Stack every head along the leading dim so max/exp/sum/reciprocal run as a
    # SINGLE batched softmax pass instead of nh tiny XLU/EUP/VPU chains.
    s = jnp.concatenate(s_heads, axis=0)                    # (nh*blk_b, L, L) f32
    s = s - jnp.max(s, axis=-1, keepdims=True)
    p = jnp.exp(s)
    p = p * pl.reciprocal(jnp.sum(p, axis=-1, keepdims=True), approx=True)
    p_bf = p.astype(jnp.bfloat16)

    # ---- context per head, lane-concat heads, then ONE fused (n_tok,C)@(C,C)
    # output projection (replaces nh accumulated (n_tok,hd)@(hd,C) dots).
    ctx_heads = []
    for h in range(nh):
        vh = v_bf[:, h * hd:(h + 1) * hd].reshape(blk_b, L, hd)
        ph = p_bf[h * blk_b:(h + 1) * blk_b]
        ctx_heads.append(
            jnp.einsum('blm,bmd->bld', ph, vh,
                       preferred_element_type=jnp.float32).reshape(n_tok, hd))
    ctx = jnp.concatenate(ctx_heads, axis=-1)               # (n_tok, C)
    attn = jnp.dot(ctx.astype(jnp.bfloat16), ow_ref[...],
                   preferred_element_type=jnp.float32) + ob_ref[...]

    # ---- residual + LayerNorm1 (Dropout = identity in eval mode) -----------
    y = _layernorm(x + attn, g1_ref[...], be1_ref[...])

    # ---- FFN: Linear(C->H) -> ReLU -> (Dropout=id) -> Linear(H->C), bf16 dots
    hid = jnp.maximum(
        jnp.dot(y.astype(jnp.bfloat16), w1_ref[...],
                preferred_element_type=jnp.float32) + b1_ref[...], 0.0)
    ffn = jnp.dot(hid.astype(jnp.bfloat16), w2_ref[...],
                  preferred_element_type=jnp.float32) + b2_ref[...]

    # ---- residual + LayerNorm2; lane-dense (blk_b, L, C) store, no transpose.
    z = _layernorm(y + ffn, g2_ref[...], be2_ref[...])
    o_ref[...] = z.reshape(blk_b, L, C).astype(o_ref.dtype)


def _kernel_vmem_bytes(blk_b, L, C, H, nh, io_bytes):
    """Generous per-step VMEM estimate for the working set of one grid step."""
    n_tok = blk_b * L
    io = 2 * 2 * n_tok * C * io_bytes               # x + out blocks, double-buffered
    weights = (4 * C * C + 2 * C * H) * 2           # bf16 weights, single-buffered
    biases = (5 * C + H) * 4 * 2
    slabs = n_tok * (10 * C + 2 * H) * 4            # f32/bf16 activation slabs
    scores = 3 * nh * n_tok * L * 4                 # s, p (+ headroom), f32
    return io + weights + biases + slabs + scores


def _pick_block_batch(B, L, C, H, nh, io_bytes):
    """Pick batch elements fused per grid step + an explicit VMEM limit.

    Largest divisor of B whose working set fits the per-generation VMEM budget,
    but keeping >=2 grid steps whenever B allows it so the "parallel" batch axis
    can shard across v7x's two TensorCores (single-TC v5e/v6e only pay one extra
    ~0.35us pipeline step for this).
    """
    try:
        phys = int(pltpu.get_tpu_info().vmem_capacity_bytes)   # 128 MiB v5e/v6e, 64 MiB v7x
    except Exception:
        phys = 64 << 20                                        # v7x-safe fallback
    vmem_limit = min(phys * 3 // 4, 96 << 20)
    budget = int(vmem_limit * 0.8)

    divisors = [d for d in range(1, B + 1) if B % d == 0]
    fitting = [d for d in divisors
               if _kernel_vmem_bytes(d, L, C, H, nh, io_bytes) <= budget]
    if not fitting:
        # TODO(synk): even a single (1, L, C) block overflows VMEM at this L;
        # would need an additional sequence-tiling axis.
        fitting = [1]
    multi = [d for d in fitting if B // d >= 2]
    blk_b = multi[-1] if multi else fitting[-1]
    return blk_b, int(vmem_limit)


@functools.partial(jax.jit, static_argnums=2)
def swin_transformer_1d_block(x_bcl, params, num_heads):
    """x_bcl: (B, C, L) exactly like the PyTorch module.  Returns (B, C, L)."""
    B, C, L = x_bcl.shape
    H = params["w1"].shape[0]
    nh = num_heads
    hd = C // nh
    scale = 1.0 / math.sqrt(hd)

    # ---- host-side weight plumbing (weights only; folded at compile time) ----
    in_w, in_b = params["in_w"], params["in_b"]
    wq_t = (in_w[0:C].T * scale).astype(jnp.bfloat16)      # scale folded into q
    wk_t = in_w[C:2 * C].T.astype(jnp.bfloat16)
    wv_t = in_w[2 * C:3 * C].T.astype(jnp.bfloat16)
    bq = in_b[:, 0:C] * scale                              # f32 post-accum add
    bv = in_b[:, 2 * C:3 * C]                              # key bias dropped (cancels)
    ow_t = params["out_w"].T.astype(jnp.bfloat16)
    w1_t = params["w1"].T.astype(jnp.bfloat16)
    w2_t = params["w2"].T.astype(jnp.bfloat16)

    # Lane-dense token-major layout for the kernel (last dim = C on lanes), so
    # every load/store is dense and the kernel carries no transposes.
    x_blc = jnp.transpose(x_bcl, (0, 2, 1))

    io_bytes = x_bcl.dtype.itemsize
    blk_b, vmem_limit = _pick_block_batch(B, L, C, H, nh, io_bytes)
    grid = (B // blk_b,)

    def const_spec(shape):
        # Constant across the grid -> single-buffered (no wasted 2x VMEM).
        return pl.BlockSpec(shape, lambda *_: (0,) * len(shape),
                            pipeline_mode=pl.Buffered(1))

    n_tok_total = B * L
    cost = pl.CostEstimate(
        flops=int(n_tok_total * (8 * C * C + 4 * C * H + 4 * L * C)),
        transcendentals=int(B * nh * L * L + 2 * n_tok_total),
        bytes_accessed=int(2 * n_tok_total * C * io_bytes
                           + (4 * C * C + 2 * C * H) * 2 + (5 * C + H) * 4),
    )

    out_blc = pl.pallas_call(
        functools.partial(swin_block_kernel, num_heads=num_heads),
        out_shape=jax.ShapeDtypeStruct((B, L, C), x_bcl.dtype),
        grid_spec=pltpu.PrefetchScalarGridSpec(
            num_scalar_prefetch=0,
            grid=grid,
            in_specs=[
                pl.BlockSpec((blk_b, L, C), lambda i: (i, 0, 0)),   # x (token-major)
                const_spec((C, C)), const_spec((C, C)), const_spec((C, C)),  # wq,wk,wv
                const_spec((1, C)), const_spec((1, C)),             # bq, bv
                const_spec((C, C)), const_spec((1, C)),             # out_proj w^T, b
                const_spec((1, C)), const_spec((1, C)),             # norm1 gamma/beta
                const_spec((C, H)), const_spec((1, H)),             # ffn[0] w^T, b
                const_spec((H, C)), const_spec((1, C)),             # ffn[3] w^T, b
                const_spec((1, C)), const_spec((1, C)),             # norm2 gamma/beta
            ],
            out_specs=pl.BlockSpec((blk_b, L, C), lambda i: (i, 0, 0)),
        ),
        compiler_params=pltpu.CompilerParams(
            dimension_semantics=("parallel",),   # batch axis -> megacore on v7x
            vmem_limit_bytes=vmem_limit,
        ),
        cost_estimate=cost,
    )(x_blc,
      wq_t, wk_t, wv_t, bq, bv,
      ow_t, params["out_b"],
      params["g1"], params["be1"],
      w1_t, params["b1"], w2_t, params["b2"],
      params["g2"], params["be2"])

    return jnp.transpose(out_blc, (0, 2, 1))


def init_params(key, input_dim, hidden_dim):
    C, H = input_dim, hidden_dim
    ks = jax.random.split(key, 8)
    s = 0.05
    return {
        "in_w":  jax.random.normal(ks[0], (3 * C, C), jnp.float32) * s,
        "in_b":  jax.random.normal(ks[1], (1, 3 * C), jnp.float32) * s,
        "out_w": jax.random.normal(ks[2], (C, C), jnp.float32) * s,
        "out_b": jax.random.normal(ks[3], (1, C), jnp.float32) * s,
        "g1":    jnp.ones((1, C), jnp.float32),
        "be1":   jnp.zeros((1, C), jnp.float32),
        "w1":    jax.random.normal(ks[4], (H, C), jnp.float32) * s,
        "b1":    jax.random.normal(ks[5], (1, H), jnp.float32) * s,
        "w2":    jax.random.normal(ks[6], (C, H), jnp.float32) * s,
        "b2":    jax.random.normal(ks[7], (1, C), jnp.float32) * s,
        "g2":    jnp.ones((1, C), jnp.float32),
        "be2":   jnp.zeros((1, C), jnp.float32),
    }


def swin_reference(x_bcl, params, num_heads):
    """Pure-JAX mirror of the PyTorch forward (eval mode), for validation."""
    B, C, L = x_bcl.shape
    nh = num_heads
    hd = C // nh
    x = jnp.transpose(x_bcl, (0, 2, 1)).astype(jnp.float32)        # (B, L, C)

    qkv = jnp.einsum('blc,dc->bld', x, params["in_w"]) + params["in_b"][0]
    q = qkv[..., 0:C] / math.sqrt(hd)
    k = qkv[..., C:2 * C]
    v = qkv[..., 2 * C:3 * C]

    def split(t):   # (B, L, C) -> (B, nh, L, hd)
        return jnp.transpose(t.reshape(B, L, nh, hd), (0, 2, 1, 3))

    qh, kh, vh = split(q), split(k), split(v)
    s = jnp.einsum('bhld,bhmd->bhlm', qh, kh)
    p = jax.nn.softmax(s, axis=-1)
    ctx = jnp.einsum('bhlm,bhmd->bhld', p, vh)
    ctx = jnp.transpose(ctx, (0, 2, 1, 3)).reshape(B, L, C)
    attn = jnp.einsum('blc,dc->bld', ctx, params["out_w"]) + params["out_b"][0]

    def ln(t, g, b):
        mu = jnp.mean(t, axis=-1, keepdims=True)
        var = jnp.mean((t - mu) ** 2, axis=-1, keepdims=True)
        return (t - mu) / jnp.sqrt(var + 1e-5) * g[0] + b[0]

    y = ln(x + attn, params["g1"], params["be1"])
    hid = jax.nn.relu(jnp.einsum('blc,hc->blh', y, params["w1"]) + params["b1"][0])
    ffn = jnp.einsum('blh,ch->blc', hid, params["w2"]) + params["b2"][0]
    z = ln(y + ffn, params["g2"], params["be2"])
    return jnp.transpose(z, (0, 2, 1))


if __name__ == "__main__":
    # Small shapes consistent with the module's forward: x is (B, C=input_dim, L).
    B, input_dim, L = 2, 32, 16
    hidden_dim, num_heads, window_size = 64, 4, 4   # window_size unused by forward()

    key = jax.random.PRNGKey(0)
    kx, kp = jax.random.split(key)
    x = jax.random.normal(kx, (B, input_dim, L), jnp.float32)
    params = init_params(kp, input_dim, hidden_dim)

    out = swin_transformer_1d_block(x, params, num_heads)
    jax.block_until_ready(out)
    assert out.shape == (B, input_dim, L)

    ref = swin_reference(x, params, num_heads)
    err = float(jnp.max(jnp.abs(out - ref)))
    # bf16 MXU operands + approximate (EUP) softmax reciprocal -> loose tolerance.
    assert err < 5e-2, f"max abs err vs reference: {err}"
    print("KERNEL_OK")
</pallas_src>

<mosaic_0001>
module attributes {stable_mosaic.version = 11 : i64} {
  func.func @swin_block_kernel(%arg0: i32, %arg1: memref<1x16x32xf32, #tpu.memory_space<vmem>>, %arg2: memref<32x32xbf16, #tpu.memory_space<vmem>>, %arg3: memref<32x32xbf16, #tpu.memory_space<vmem>>, %arg4: memref<32x32xbf16, #tpu.memory_space<vmem>>, %arg5: memref<1x32xf32, #tpu.memory_space<vmem>>, %arg6: memref<1x32xf32, #tpu.memory_space<vmem>>, %arg7: memref<32x32xbf16, #tpu.memory_space<vmem>>, %arg8: memref<1x32xf32, #tpu.memory_space<vmem>>, %arg9: memref<1x32xf32, #tpu.memory_space<vmem>>, %arg10: memref<1x32xf32, #tpu.memory_space<vmem>>, %arg11: memref<32x64xbf16, #tpu.memory_space<vmem>>, %arg12: memref<1x64xf32, #tpu.memory_space<vmem>>, %arg13: memref<64x32xbf16, #tpu.memory_space<vmem>>, %arg14: memref<1x32xf32, #tpu.memory_space<vmem>>, %arg15: memref<1x32xf32, #tpu.memory_space<vmem>>, %arg16: memref<1x32xf32, #tpu.memory_space<vmem>>, %arg17: memref<1x16x32xf32, #tpu.memory_space<vmem>>) attributes {dimension_semantics = [#tpu.dimension_semantics<parallel>], iteration_bounds = array<i64: 2>, scalar_prefetch = 0 : i64, scratch_operands = 0 : i64, tpu.core_type = #tpu.core_type<tc>, window_params = [{transform_indices = @transform_0, window_bounds = array<i64: 1, 16, 32>}, {pipeline_mode = #tpu.pipeline_mode<synchronous>, transform_indices = @transform_1, window_bounds = array<i64: 32, 32>}, {pipeline_mode = #tpu.pipeline_mode<synchronous>, transform_indices = @transform_2, window_bounds = array<i64: 32, 32>}, {pipeline_mode = #tpu.pipeline_mode<synchronous>, transform_indices = @transform_3, window_bounds = array<i64: 32, 32>}, {pipeline_mode = #tpu.pipeline_mode<synchronous>, transform_indices = @transform_4, window_bounds = array<i64: 1, 32>}, {pipeline_mode = #tpu.pipeline_mode<synchronous>, transform_indices = @transform_5, window_bounds = array<i64: 1, 32>}, {pipeline_mode = #tpu.pipeline_mode<synchronous>, transform_indices = @transform_6, window_bounds = array<i64: 32, 32>}, {pipeline_mode = #tpu.pipeline_mode<synchronous>, transform_indices = @transform_7, window_bounds = array<i64: 1, 32>}, {pipeline_mode = #tpu.pipeline_mode<synchronous>, transform_indices = @transform_8, window_bounds = array<i64: 1, 32>}, {pipeline_mode = #tpu.pipeline_mode<synchronous>, transform_indices = @transform_9, window_bounds = array<i64: 1, 32>}, {pipeline_mode = #tpu.pipeline_mode<synchronous>, transform_indices = @transform_10, window_bounds = array<i64: 32, 64>}, {pipeline_mode = #tpu.pipeline_mode<synchronous>, transform_indices = @transform_11, window_bounds = array<i64: 1, 64>}, {pipeline_mode = #tpu.pipeline_mode<synchronous>, transform_indices = @transform_12, window_bounds = array<i64: 64, 32>}, {pipeline_mode = #tpu.pipeline_mode<synchronous>, transform_indices = @transform_13, window_bounds = array<i64: 1, 32>}, {pipeline_mode = #tpu.pipeline_mode<synchronous>, transform_indices = @transform_14, window_bounds = array<i64: 1, 32>}, {pipeline_mode = #tpu.pipeline_mode<synchronous>, transform_indices = @transform_15, window_bounds = array<i64: 1, 32>}, {transform_indices = @transform_16, window_bounds = array<i64: 1, 16, 32>}]} {
    %c0 = arith.constant 0 : index
    %c0_0 = arith.constant 0 : index
    %c0_1 = arith.constant 0 : index
    %0 = vector.load %arg1[%c0, %c0_0, %c0_1] : memref<1x16x32xf32, #tpu.memory_space<vmem>>, vector<1x16x32xf32>
    %1 = vector.shape_cast %0 : vector<1x16x32xf32> to vector<16x32xf32>
    %2 = arith.truncf %1 : vector<16x32xf32> to vector<16x32xbf16>
    %c0_2 = arith.constant 0 : index
    %c0_3 = arith.constant 0 : index
    %3 = vector.load %arg2[%c0_2, %c0_3] : memref<32x32xbf16, #tpu.memory_space<vmem>>, vector<32x32xbf16>
    %cst = arith.constant dense<0.000000e+00> : vector<16x32xf32>
    %4 = tpu.matmul %2, %3, %cst {dimension_numbers = #tpu.dot_dimension_numbers<[1], [0], [0], [1], [0, 0, 1, 1], [], []>} : vector<16x32xbf16>, vector<32x32xbf16>, vector<16x32xf32> -> vector<16x32xf32>
    %c0_4 = arith.constant 0 : index
    %c0_5 = arith.constant 0 : index
    %5 = vector.load %arg5[%c0_4, %c0_5] : memref<1x32xf32, #tpu.memory_space<vmem>>, vector<1x32xf32>
    %6 = vector.broadcast %5 : vector<1x32xf32> to vector<16x32xf32>
    %7 = arith.addf %4, %6 : vector<16x32xf32>
    %c0_6 = arith.constant 0 : index
    %c0_7 = arith.constant 0 : index
    %8 = vector.load %arg3[%c0_6, %c0_7] : memref<32x32xbf16, #tpu.memory_space<vmem>>, vector<32x32xbf16>
    %cst_8 = arith.constant dense<0.000000e+00> : vector<16x32xf32>
    %9 = tpu.matmul %2, %8, %cst_8 {dimension_numbers = #tpu.dot_dimension_numbers<[1], [0], [0], [1], [0, 0, 1, 1], [], []>} : vector<16x32xbf16>, vector<32x32xbf16>, vector<16x32xf32> -> vector<16x32xf32>
    %c0_9 = arith.constant 0 : index
    %c0_10 = arith.constant 0 : index
    %10 = vector.load %arg4[%c0_9, %c0_10] : memref<32x32xbf16, #tpu.memory_space<vmem>>, vector<32x32xbf16>
    %cst_11 = arith.constant dense<0.000000e+00> : vector<16x32xf32>
    %11 = tpu.matmul %2, %10, %cst_11 {dimension_numbers = #tpu.dot_dimension_numbers<[1], [0], [0], [1], [0, 0, 1, 1], [], []>} : vector<16x32xbf16>, vector<32x32xbf16>, vector<16x32xf32> -> vector<16x32xf32>
    %c0_12 = arith.constant 0 : index
    %c0_13 = arith.constant 0 : index
    %12 = vector.load %arg6[%c0_12, %c0_13] : memref<1x32xf32, #tpu.memory_space<vmem>>, vector<1x32xf32>
    %13 = vector.broadcast %12 : vector<1x32xf32> to vector<16x32xf32>
    %14 = arith.addf %11, %13 : vector<16x32xf32>
    %15 = arith.truncf %7 : vector<16x32xf32> to vector<16x32xbf16>
    %16 = arith.truncf %9 : vector<16x32xf32> to vector<16x32xbf16>
    %17 = arith.truncf %14 : vector<16x32xf32> to vector<16x32xbf16>
    %18 = vector.extract_strided_slice %15 {offsets = [0, 0], sizes = [16, 8], strides = [1, 1]} : vector<16x32xbf16> to vector<16x8xbf16>
    %19 = vector.shape_cast %18 : vector<16x8xbf16> to vector<1x16x8xbf16>
    %20 = vector.extract_strided_slice %16 {offsets = [0, 0], sizes = [16, 8], strides = [1, 1]} : vector<16x32xbf16> to vector<16x8xbf16>
    %21 = vector.shape_cast %20 : vector<16x8xbf16> to vector<1x16x8xbf16>
    "tpu.trace_start"() <{level = 10 : i32, message = "bld,bmd->blm"}> : () -> ()
    %cst_14 = arith.constant dense<0.000000e+00> : vector<1x16x16xf32>
    %22 = tpu.matmul %19, %21, %cst_14 {dimension_numbers = #tpu.dot_dimension_numbers<[2], [2], [1], [1], [0, 0, 0, 1, 1, 1], [0], [0]>} : vector<1x16x8xbf16>, vector<1x16x8xbf16>, vector<1x16x16xf32> -> vector<1x16x16xf32>
    "tpu.trace_stop"() : () -> ()
    %23 = vector.extract_strided_slice %15 {offsets = [0, 8], sizes = [16, 8], strides = [1, 1]} : vector<16x32xbf16> to vector<16x8xbf16>
    %24 = vector.shape_cast %23 : vector<16x8xbf16> to vector<1x16x8xbf16>
    %25 = vector.extract_strided_slice %16 {offsets = [0, 8], sizes = [16, 8], strides = [1, 1]} : vector<16x32xbf16> to vector<16x8xbf16>
    %26 = vector.shape_cast %25 : vector<16x8xbf16> to vector<1x16x8xbf16>
    "tpu.trace_start"() <{level = 10 : i32, message = "bld,bmd->blm"}> : () -> ()
    %cst_15 = arith.constant dense<0.000000e+00> : vector<1x16x16xf32>
    %27 = tpu.matmul %24, %26, %cst_15 {dimension_numbers = #tpu.dot_dimension_numbers<[2], [2], [1], [1], [0, 0, 0, 1, 1, 1], [0], [0]>} : vector<1x16x8xbf16>, vector<1x16x8xbf16>, vector<1x16x16xf32> -> vector<1x16x16xf32>
    "tpu.trace_stop"() : () -> ()
    %28 = vector.extract_strided_slice %15 {offsets = [0, 16], sizes = [16, 8], strides = [1, 1]} : vector<16x32xbf16> to vector<16x8xbf16>
    %29 = vector.shape_cast %28 : vector<16x8xbf16> to vector<1x16x8xbf16>
    %30 = vector.extract_strided_slice %16 {offsets = [0, 16], sizes = [16, 8], strides = [1, 1]} : vector<16x32xbf16> to vector<16x8xbf16>
    %31 = vector.shape_cast %30 : vector<16x8xbf16> to vector<1x16x8xbf16>
    "tpu.trace_start"() <{level = 10 : i32, message = "bld,bmd->blm"}> : () -> ()
    %cst_16 = arith.constant dense<0.000000e+00> : vector<1x16x16xf32>
    %32 = tpu.matmul %29, %31, %cst_16 {dimension_numbers = #tpu.dot_dimension_numbers<[2], [2], [1], [1], [0, 0, 0, 1, 1, 1], [0], [0]>} : vector<1x16x8xbf16>, vector<1x16x8xbf16>, vector<1x16x16xf32> -> vector<1x16x16xf32>
    "tpu.trace_stop"() : () -> ()
    %33 = vector.extract_strided_slice %15 {offsets = [0, 24], sizes = [16, 8], strides = [1, 1]} : vector<16x32xbf16> to vector<16x8xbf16>
    %34 = vector.shape_cast %33 : vector<16x8xbf16> to vector<1x16x8xbf16>
    %35 = vector.extract_strided_slice %16 {offsets = [0, 24], sizes = [16, 8], strides = [1, 1]} : vector<16x32xbf16> to vector<16x8xbf16>
    %36 = vector.shape_cast %35 : vector<16x8xbf16> to vector<1x16x8xbf16>
    "tpu.trace_start"() <{level = 10 : i32, message = "bld,bmd->blm"}> : () -> ()
    %cst_17 = arith.constant dense<0.000000e+00> : vector<1x16x16xf32>
    %37 = tpu.matmul %34, %36, %cst_17 {dimension_numbers = #tpu.dot_dimension_numbers<[2], [2], [1], [1], [0, 0, 0, 1, 1, 1], [0], [0]>} : vector<1x16x8xbf16>, vector<1x16x8xbf16>, vector<1x16x16xf32> -> vector<1x16x16xf32>
    "tpu.trace_stop"() : () -> ()
    %38 = tpu.concatenate %22, %27, %32, %37 in 0 : vector<1x16x16xf32>, vector<1x16x16xf32>, vector<1x16x16xf32>, vector<1x16x16xf32> -> vector<4x16x16xf32>
    %cst_18 = arith.constant dense<0xFF800000> : vector<4x16xf32>
    %39 = vector.multi_reduction <maximumf>, %38, %cst_18 [2] : vector<4x16x16xf32> to vector<4x16xf32>
    %40 = vector.shape_cast %39 : vector<4x16xf32> to vector<4x16x1xf32>
    %41 = vector.broadcast %40 : vector<4x16x1xf32> to vector<4x16x16xf32>
    %42 = arith.subf %38, %41 : vector<4x16x16xf32>
    %43 = math.exp %42 : vector<4x16x16xf32>
    %cst_19 = arith.constant dense<0.000000e+00> : vector<4x16xf32>
    %44 = vector.multi_reduction <add>, %43, %cst_19 [2] : vector<4x16x16xf32> to vector<4x16xf32>
    %45 = vector.shape_cast %44 : vector<4x16xf32> to vector<4x16x1xf32>
    %46 = tpu.reciprocal %45 {approx = true} : vector<4x16x1xf32> -> vector<4x16x1xf32>
    %47 = vector.broadcast %46 : vector<4x16x1xf32> to vector<4x16x16xf32>
    %48 = arith.mulf %43, %47 : vector<4x16x16xf32>
    %49 = arith.truncf %48 : vector<4x16x16xf32> to vector<4x16x16xbf16>
    %50 = vector.extract_strided_slice %17 {offsets = [0, 0], sizes = [16, 8], strides = [1, 1]} : vector<16x32xbf16> to vector<16x8xbf16>
    %51 = vector.shape_cast %50 : vector<16x8xbf16> to vector<1x16x8xbf16>
    %52 = vector.extract_strided_slice %49 {offsets = [0, 0, 0], sizes = [1, 16, 16], strides = [1, 1, 1]} : vector<4x16x16xbf16> to vector<1x16x16xbf16>
    "tpu.trace_start"() <{level = 10 : i32, message = "blm,bmd->bld"}> : () -> ()
    %cst_20 = arith.constant dense<0.000000e+00> : vector<1x16x8xf32>
    %53 = tpu.matmul %52, %51, %cst_20 {dimension_numbers = #tpu.dot_dimension_numbers<[2], [1], [1], [2], [0, 0, 0, 1, 1, 2], [0], [0]>} : vector<1x16x16xbf16>, vector<1x16x8xbf16>, vector<1x16x8xf32> -> vector<1x16x8xf32>
    "tpu.trace_stop"() : () -> ()
    %54 = vector.shape_cast %53 : vector<1x16x8xf32> to vector<16x8xf32>
    %55 = vector.extract_strided_slice %17 {offsets = [0, 8], sizes = [16, 8], strides = [1, 1]} : vector<16x32xbf16> to vector<16x8xbf16>
    %56 = vector.shape_cast %55 : vector<16x8xbf16> to vector<1x16x8xbf16>
    %57 = vector.extract_strided_slice %49 {offsets = [1, 0, 0], sizes = [1, 16, 16], strides = [1, 1, 1]} : vector<4x16x16xbf16> to vector<1x16x16xbf16>
    "tpu.trace_start"() <{level = 10 : i32, message = "blm,bmd->bld"}> : () -> ()
    %cst_21 = arith.constant dense<0.000000e+00> : vector<1x16x8xf32>
    %58 = tpu.matmul %57, %56, %cst_21 {dimension_numbers = #tpu.dot_dimension_numbers<[2], [1], [1], [2], [0, 0, 0, 1, 1, 2], [0], [0]>} : vector<1x16x16xbf16>, vector<1x16x8xbf16>, vector<1x16x8xf32> -> vector<1x16x8xf32>
    "tpu.trace_stop"() : () -> ()
    %59 = vector.shape_cast %58 : vector<1x16x8xf32> to vector<16x8xf32>
    %60 = vector.extract_strided_slice %17 {offsets = [0, 16], sizes = [16, 8], strides = [1, 1]} : vector<16x32xbf16> to vector<16x8xbf16>
    %61 = vector.shape_cast %60 : vector<16x8xbf16> to vector<1x16x8xbf16>
    %62 = vector.extract_strided_slice %49 {offsets = [2, 0, 0], sizes = [1, 16, 16], strides = [1, 1, 1]} : vector<4x16x16xbf16> to vector<1x16x16xbf16>
    "tpu.trace_start"() <{level = 10 : i32, message = "blm,bmd->bld"}> : () -> ()
    %cst_22 = arith.constant dense<0.000000e+00> : vector<1x16x8xf32>
    %63 = tpu.matmul %62, %61, %cst_22 {dimension_numbers = #tpu.dot_dimension_numbers<[2], [1], [1], [2], [0, 0, 0, 1, 1, 2], [0], [0]>} : vector<1x16x16xbf16>, vector<1x16x8xbf16>, vector<1x16x8xf32> -> vector<1x16x8xf32>
    "tpu.trace_stop"() : () -> ()
    %64 = vector.shape_cast %63 : vector<1x16x8xf32> to vector<16x8xf32>
    %65 = vector.extract_strided_slice %17 {offsets = [0, 24], sizes = [16, 8], strides = [1, 1]} : vector<16x32xbf16> to vector<16x8xbf16>
    %66 = vector.shape_cast %65 : vector<16x8xbf16> to vector<1x16x8xbf16>
    %67 = vector.extract_strided_slice %49 {offsets = [3, 0, 0], sizes = [1, 16, 16], strides = [1, 1, 1]} : vector<4x16x16xbf16> to vector<1x16x16xbf16>
    "tpu.trace_start"() <{level = 10 : i32, message = "blm,bmd->bld"}> : () -> ()
    %cst_23 = arith.constant dense<0.000000e+00> : vector<1x16x8xf32>
    %68 = tpu.matmul %67, %66, %cst_23 {dimension_numbers = #tpu.dot_dimension_numbers<[2], [1], [1], [2], [0, 0, 0, 1, 1, 2], [0], [0]>} : vector<1x16x16xbf16>, vector<1x16x8xbf16>, vector<1x16x8xf32> -> vector<1x16x8xf32>
    "tpu.trace_stop"() : () -> ()
    %69 = vector.shape_cast %68 : vector<1x16x8xf32> to vector<16x8xf32>
    %70 = tpu.concatenate %54, %59, %64, %69 in 1 : vector<16x8xf32>, vector<16x8xf32>, vector<16x8xf32>, vector<16x8xf32> -> vector<16x32xf32>
    %71 = arith.truncf %70 : vector<16x32xf32> to vector<16x32xbf16>
    %c0_24 = arith.constant 0 : index
    %c0_25 = arith.constant 0 : index
    %72 = vector.load %arg7[%c0_24, %c0_25] : memref<32x32xbf16, #tpu.memory_space<vmem>>, vector<32x32xbf16>
    %cst_26 = arith.constant dense<0.000000e+00> : vector<16x32xf32>
    %73 = tpu.matmul %71, %72, %cst_26 {dimension_numbers = #tpu.dot_dimension_numbers<[1], [0], [0], [1], [0, 0, 1, 1], [], []>} : vector<16x32xbf16>, vector<32x32xbf16>, vector<16x32xf32> -> vector<16x32xf32>
    %c0_27 = arith.constant 0 : index
    %c0_28 = arith.constant 0 : index
    %74 = vector.load %arg8[%c0_27, %c0_28] : memref<1x32xf32, #tpu.memory_space<vmem>>, vector<1x32xf32>
    %75 = vector.broadcast %74 : vector<1x32xf32> to vector<16x32xf32>
    %76 = arith.addf %73, %75 : vector<16x32xf32>
    %77 = arith.addf %1, %76 : vector<16x32xf32>
    %c0_29 = arith.constant 0 : index
    %c0_30 = arith.constant 0 : index
    %78 = vector.load %arg9[%c0_29, %c0_30] : memref<1x32xf32, #tpu.memory_space<vmem>>, vector<1x32xf32>
    %c0_31 = arith.constant 0 : index
    %c0_32 = arith.constant 0 : index
    %79 = vector.load %arg10[%c0_31, %c0_32] : memref<1x32xf32, #tpu.memory_space<vmem>>, vector<1x32xf32>
    %cst_33 = arith.constant dense<0.000000e+00> : vector<16xf32>
    %80 = vector.multi_reduction <add>, %77, %cst_33 [1] : vector<16x32xf32> to vector<16xf32>
    %81 = vector.shape_cast %80 : vector<16xf32> to vector<16x1xf32>
    %cst_34 = arith.constant 3.200000e+01 : f32
    %82 = vector.broadcast %cst_34 : f32 to vector<16x1xf32>
    %83 = arith.divf %81, %82 : vector<16x1xf32>
    %84 = vector.broadcast %83 : vector<16x1xf32> to vector<16x32xf32>
    %85 = arith.subf %77, %84 : vector<16x32xf32>
    %86 = arith.mulf %85, %85 : vector<16x32xf32>
    %cst_35 = arith.constant dense<0.000000e+00> : vector<16xf32>
    %87 = vector.multi_reduction <add>, %86, %cst_35 [1] : vector<16x32xf32> to vector<16xf32>
    %88 = vector.shape_cast %87 : vector<16xf32> to vector<16x1xf32>
    %cst_36 = arith.constant 3.200000e+01 : f32
    %89 = vector.broadcast %cst_36 : f32 to vector<16x1xf32>
    %90 = arith.divf %88, %89 : vector<16x1xf32>
    %cst_37 = arith.constant 9.99999974E-6 : f32
    %91 = vector.broadcast %cst_37 : f32 to vector<16x1xf32>
    %92 = arith.addf %90, %91 : vector<16x1xf32>
    %93 = math.rsqrt %92 : vector<16x1xf32>
    %94 = vector.broadcast %93 : vector<16x1xf32> to vector<16x32xf32>
    %95 = arith.mulf %85, %94 : vector<16x32xf32>
    %96 = vector.broadcast %78 : vector<1x32xf32> to vector<16x32xf32>
    %97 = arith.mulf %95, %96 : vector<16x32xf32>
    %98 = vector.broadcast %79 : vector<1x32xf32> to vector<16x32xf32>
    %99 = arith.addf %97, %98 : vector<16x32xf32>
    %100 = arith.truncf %99 : vector<16x32xf32> to vector<16x32xbf16>
    %c0_38 = arith.constant 0 : index
    %c0_39 = arith.constant 0 : index
    %101 = vector.load %arg11[%c0_38, %c0_39] : memref<32x64xbf16, #tpu.memory_space<vmem>>, vector<32x64xbf16>
    %cst_40 = arith.constant dense<0.000000e+00> : vector<16x64xf32>
    %102 = tpu.matmul %100, %101, %cst_40 {dimension_numbers = #tpu.dot_dimension_numbers<[1], [0], [0], [1], [0, 0, 1, 1], [], []>} : vector<16x32xbf16>, vector<32x64xbf16>, vector<16x64xf32> -> vector<16x64xf32>
    %c0_41 = arith.constant 0 : index
    %c0_42 = arith.constant 0 : index
    %103 = vector.load %arg12[%c0_41, %c0_42] : memref<1x64xf32, #tpu.memory_space<vmem>>, vector<1x64xf32>
    %104 = vector.broadcast %103 : vector<1x64xf32> to vector<16x64xf32>
    %105 = arith.addf %102, %104 : vector<16x64xf32>
    %cst_43 = arith.constant 0.000000e+00 : f32
    %106 = vector.broadcast %cst_43 : f32 to vector<16x64xf32>
    %107 = arith.maximumf %105, %106 : vector<16x64xf32>
    %108 = arith.truncf %107 : vector<16x64xf32> to vector<16x64xbf16>
    %c0_44 = arith.constant 0 : index
    %c0_45 = arith.constant 0 : index
    %109 = vector.load %arg13[%c0_44, %c0_45] : memref<64x32xbf16, #tpu.memory_space<vmem>>, vector<64x32xbf16>
    %cst_46 = arith.constant dense<0.000000e+00> : vector<16x32xf32>
    %110 = tpu.matmul %108, %109, %cst_46 {dimension_numbers = #tpu.dot_dimension_numbers<[1], [0], [0], [1], [0, 0, 1, 1], [], []>} : vector<16x64xbf16>, vector<64x32xbf16>, vector<16x32xf32> -> vector<16x32xf32>
    %c0_47 = arith.constant 0 : index
    %c0_48 = arith.constant 0 : index
    %111 = vector.load %arg14[%c0_47, %c0_48] : memref<1x32xf32, #tpu.memory_space<vmem>>, vector<1x32xf32>
    %112 = vector.broadcast %111 : vector<1x32xf32> to vector<16x32xf32>
    %113 = arith.addf %110, %112 : vector<16x32xf32>
    %114 = arith.addf %99, %113 : vector<16x32xf32>
    %c0_49 = arith.constant 0 : index
    %c0_50 = arith.constant 0 : index
    %115 = vector.load %arg15[%c0_49, %c0_50] : memref<1x32xf32, #tpu.memory_space<vmem>>, vector<1x32xf32>
    %c0_51 = arith.constant 0 : index
    %c0_52 = arith.constant 0 : index
    %116 = vector.load %arg16[%c0_51, %c0_52] : memref<1x32xf32, #tpu.memory_space<vmem>>, vector<1x32xf32>
    %cst_53 = arith.constant dense<0.000000e+00> : vector<16xf32>
    %117 = vector.multi_reduction <add>, %114, %cst_53 [1] : vector<16x32xf32> to vector<16xf32>
    %118 = vector.shape_cast %117 : vector<16xf32> to vector<16x1xf32>
    %cst_54 = arith.constant 3.200000e+01 : f32
    %119 = vector.broadcast %cst_54 : f32 to vector<16x1xf32>
    %120 = arith.divf %118, %119 : vector<16x1xf32>
    %121 = vector.broadcast %120 : vector<16x1xf32> to vector<16x32xf32>
    %122 = arith.subf %114, %121 : vector<16x32xf32>
    %123 = arith.mulf %122, %122 : vector<16x32xf32>
    %cst_55 = arith.constant dense<0.000000e+00> : vector<16xf32>
    %124 = vector.multi_reduction <add>, %123, %cst_55 [1] : vector<16x32xf32> to vector<16xf32>
    %125 = vector.shape_cast %124 : vector<16xf32> to vector<16x1xf32>
    %cst_56 = arith.constant 3.200000e+01 : f32
    %126 = vector.broadcast %cst_56 : f32 to vector<16x1xf32>
    %127 = arith.divf %125, %126 : vector<16x1xf32>
    %cst_57 = arith.constant 9.99999974E-6 : f32
    %128 = vector.broadcast %cst_57 : f32 to vector<16x1xf32>
    %129 = arith.addf %127, %128 : vector<16x1xf32>
    %130 = math.rsqrt %129 : vector<16x1xf32>
    %131 = vector.broadcast %130 : vector<16x1xf32> to vector<16x32xf32>
    %132 = arith.mulf %122, %131 : vector<16x32xf32>
    %133 = vector.broadcast %115 : vector<1x32xf32> to vector<16x32xf32>
    %134 = arith.mulf %132, %133 : vector<16x32xf32>
    %135 = vector.broadcast %116 : vector<1x32xf32> to vector<16x32xf32>
    %136 = arith.addf %134, %135 : vector<16x32xf32>
    %137 = vector.shape_cast %136 : vector<16x32xf32> to vector<1x16x32xf32>
    %c0_58 = arith.constant 0 : index
    %c0_59 = arith.constant 0 : index
    %c0_60 = arith.constant 0 : index
    %138 = vector.load %arg17[%c0_58, %c0_59, %c0_60] : memref<1x16x32xf32, #tpu.memory_space<vmem>>, vector<1x16x32xf32>
    tpu.vector_store %arg17[%c0_58, %c0_59, %c0_60], %137 {strides = array<i32>} : memref<1x16x32xf32, #tpu.memory_space<vmem>>, vector<1x16x32xf32>,
    return
  }
  func.func @transform_0(%arg0: i32) -> (i32, i32, i32) {
    %c0_i32 = arith.constant 0 : i32
    %c0_i32_0 = arith.constant 0 : i32
    %c0_i32_1 = arith.constant 0 : i32
    return %arg0, %c0_i32, %c0_i32_0 : i32, i32, i32
  }
  func.func @transform_1(%arg0: i32) -> (i32, i32) {
    %c0_i32 = arith.constant 0 : i32
    %c0_i32_0 = arith.constant 0 : i32
    %c0_i32_1 = arith.constant 0 : i32
    return %c0_i32, %c0_i32_0 : i32, i32
  }
  func.func @transform_2(%arg0: i32) -> (i32, i32) {
    %c0_i32 = arith.constant 0 : i32
    %c0_i32_0 = arith.constant 0 : i32
    %c0_i32_1 = arith.constant 0 : i32
    return %c0_i32, %c0_i32_0 : i32, i32
  }
  func.func @transform_3(%arg0: i32) -> (i32, i32) {
    %c0_i32 = arith.constant 0 : i32
    %c0_i32_0 = arith.constant 0 : i32
    %c0_i32_1 = arith.constant 0 : i32
    return %c0_i32, %c0_i32_0 : i32, i32
  }
  func.func @transform_4(%arg0: i32) -> (i32, i32) {
    %c0_i32 = arith.constant 0 : i32
    %c0_i32_0 = arith.constant 0 : i32
    %c0_i32_1 = arith.constant 0 : i32
    return %c0_i32, %c0_i32_0 : i32, i32
  }
  func.func @transform_5(%arg0: i32) -> (i32, i32) {
    %c0_i32 = arith.constant 0 : i32
    %c0_i32_0 = arith.constant 0 : i32
    %c0_i32_1 = arith.constant 0 : i32
    return %c0_i32, %c0_i32_0 : i32, i32
  }
  func.func @transform_6(%arg0: i32) -> (i32, i32) {
    %c0_i32 = arith.constant 0 : i32
    %c0_i32_0 = arith.constant 0 : i32
    %c0_i32_1 = arith.constant 0 : i32
    return %c0_i32, %c0_i32_0 : i32, i32
  }
  func.func @transform_7(%arg0: i32) -> (i32, i32) {
    %c0_i32 = arith.constant 0 : i32
    %c0_i32_0 = arith.constant 0 : i32
    %c0_i32_1 = arith.constant 0 : i32
    return %c0_i32, %c0_i32_0 : i32, i32
  }
  func.func @transform_8(%arg0: i32) -> (i32, i32) {
    %c0_i32 = arith.constant 0 : i32
    %c0_i32_0 = arith.constant 0 : i32
    %c0_i32_1 = arith.constant 0 : i32
    return %c0_i32, %c0_i32_0 : i32, i32
  }
  func.func @transform_9(%arg0: i32) -> (i32, i32) {
    %c0_i32 = arith.constant 0 : i32
    %c0_i32_0 = arith.constant 0 : i32
    %c0_i32_1 = arith.constant 0 : i32
    return %c0_i32, %c0_i32_0 : i32, i32
  }
  func.func @transform_10(%arg0: i32) -> (i32, i32) {
    %c0_i32 = arith.constant 0 : i32
    %c0_i32_0 = arith.constant 0 : i32
    %c0_i32_1 = arith.constant 0 : i32
    return %c0_i32, %c0_i32_0 : i32, i32
  }
  func.func @transform_11(%arg0: i32) -> (i32, i32) {
    %c0_i32 = arith.constant 0 : i32
    %c0_i32_0 = arith.constant 0 : i32
    %c0_i32_1 = arith.constant 0 : i32
    return %c0_i32, %c0_i32_0 : i32, i32
  }
  func.func @transform_12(%arg0: i32) -> (i32, i32) {
    %c0_i32 = arith.constant 0 : i32
    %c0_i32_0 = arith.constant 0 : i32
    %c0_i32_1 = arith.constant 0 : i32
    return %c0_i32, %c0_i32_0 : i32, i32
  }
  func.func @transform_13(%arg0: i32) -> (i32, i32) {
    %c0_i32 = arith.constant 0 : i32
    %c0_i32_0 = arith.constant 0 : i32
    %c0_i32_1 = arith.constant 0 : i32
    return %c0_i32, %c0_i32_0 : i32, i32
  }
  func.func @transform_14(%arg0: i32) -> (i32, i32) {
    %c0_i32 = arith.constant 0 : i32
    %c0_i32_0 = arith.constant 0 : i32
    %c0_i32_1 = arith.constant 0 : i32
    return %c0_i32, %c0_i32_0 : i32, i32
  }
  func.func @transform_15(%arg0: i32) -> (i32, i32) {
    %c0_i32 = arith.constant 0 : i32
    %c0_i32_0 = arith.constant 0 : i32
    %c0_i32_1 = arith.constant 0 : i32
    return %c0_i32, %c0_i32_0 : i32, i32
  }
  func.func @transform_16(%arg0: i32) -> (i32, i32, i32) {
    %c0_i32 = arith.constant 0 : i32
    %c0_i32_0 = arith.constant 0 : i32
    %c0_i32_1 = arith.constant 0 : i32
    return %arg0, %c0_i32, %c0_i32_0 : i32, i32, i32
  }
}

</mosaic_0001>

<llo_original>
// kernel: swin_transformer_1d_block.1
$region0: #{swin_transformer_1d_block.1}
  #allocation0 [shape = 'u32[]', space=smem, size = 0x4, offset = 0x4, fixed_abs, tag = 'smem constant byte address 0x4 - core index']
  #allocation1 [shape = 'u32[144,128]{1,0:T(1,128)}', space=vmem, size = 0x12000, scoped, tag = 'internal scratch']
  %s0 = inlined_call_operand.vmem [shape: f32[2,16,32], index: 0, kind: input, shape index: {}]
  %s1 = inlined_call_operand.vmem [shape: bf16[32,32], index: 1, kind: input, shape index: {}]
  %s2 = inlined_call_operand.vmem [shape: bf16[32,32], index: 2, kind: input, shape index: {}]
  %s3 = inlined_call_operand.vmem [shape: bf16[32,32], index: 3, kind: input, shape index: {}]
  %s4 = inlined_call_operand.vmem [shape: f32[1,32], index: 4, kind: input, shape index: {}]
  %s5 = inlined_call_operand.vmem [shape: f32[1,32], index: 5, kind: input, shape index: {}]
  %s6 = inlined_call_operand.vmem [shape: bf16[32,32], index: 6, kind: input, shape index: {}]
  %s7 = inlined_call_operand.vmem [shape: f32[1,32], index: 7, kind: input, shape index: {}]
  %s8 = inlined_call_operand.vmem [shape: f32[1,32], index: 8, kind: input, shape index: {}]
  %s9 = inlined_call_operand.vmem [shape: f32[1,32], index: 9, kind: input, shape index: {}]
  %s10 = inlined_call_operand.vmem [shape: bf16[32,64], index: 10, kind: input, shape index: {}]
  %s11 = inlined_call_operand.vmem [shape: f32[1,64], index: 11, kind: input, shape index: {}]
  %s12 = inlined_call_operand.vmem [shape: bf16[64,32], index: 12, kind: input, shape index: {}]
  %s13 = inlined_call_operand.vmem [shape: f32[1,32], index: 13, kind: input, shape index: {}]
  %s14 = inlined_call_operand.vmem [shape: f32[1,32], index: 14, kind: input, shape index: {}]
  %s15 = inlined_call_operand.vmem [shape: f32[1,32], index: 15, kind: input, shape index: {}]
  %s16 = inlined_call_operand.hbm [shape: f32[2,16,32], index: 16, kind: output, shape index: {}]
  %s17 = sld [smem:[#allocation0]]
  $region97: #{swin_transformer_1d_block.1} parent=0
    _
  %s19 = ssub.s32 1, %s17
  %s20 = scalar_select 0, %s19, %s17
  $region1: #{swin_transformer_1d_block.1} parent=0
    #allocation2 [shape = 'u8[16384]{0}', space=vmem, size = 0x4000, scoped, tag = 'output window, operand 0']
    #allocation3 [shape = 's32[2]{0}', space=sflag, size = 0x8, scoped, tag = 'scoped memory for swin_transformer_1d_block.1']
    %21 = vsyncpa [#allocation3], 0
    %s22 = scalar_lea.sflag [#allocation3], 1
    %23 = vsyncpa %s22, 0
    loop: start=0, step=1, limit=4
    $region2: #{swin_transformer_1d_block.1} parent=1 // loop_pre_header
      _
    $region3: #{swin_transformer_1d_block.1} parent=1 // loop_header
      %s25 = sphi 0, %s29
      %p26 = scmp.ge.s32.totalorder %s25, 4
      %s35 = sphi 0, %s37
      %s38 = sphi 0, %s35
      %s39 = sphi 0, %s38
      %s55 = sphi 0, %s39
      %s59 = sphi 0, %s59
      %s61 = sphi 0, %s59
      %s62 = sphi 0, %s61
      %s76 = sphi 0, %s62
      %s80 = sphi 0, %s80
      %s82 = sphi 0, %s80
      %s83 = sphi 0, %s82
      %s97 = sphi 0, %s83
      %s101 = sphi 0, %s101
      %s103 = sphi 0, %s101
      %s104 = sphi 0, %s103
      %s118 = sphi 0, %s104
      %s122 = sphi 0, %s122
      %s124 = sphi 0, %s122
      %s125 = sphi 0, %s124
      %s139 = sphi 0, %s125
      %s143 = sphi 0, %s143
      %s145 = sphi 0, %s143
      %s146 = sphi 0, %s145
      %s160 = sphi 0, %s146
      %s164 = sphi 0, %s164
      %s166 = sphi 0, %s164
      %s167 = sphi 0, %s166
      %s181 = sphi 0, %s167
      %s185 = sphi 0, %s185
      %s187 = sphi 0, %s185
      %s188 = sphi 0, %s187
      %s202 = sphi 0, %s188
      %s206 = sphi 0, %s206
      %s208 = sphi 0, %s206
      %s209 = sphi 0, %s208
      %s223 = sphi 0, %s209
      %s227 = sphi 0, %s227
      %s229 = sphi 0, %s227
      %s230 = sphi 0, %s229
      %s244 = sphi 0, %s230
      %s248 = sphi 0, %s248
      %s250 = sphi 0, %s248
      %s251 = sphi 0, %s250
      %s265 = sphi 0, %s251
      %s269 = sphi 0, %s269
      %s271 = sphi 0, %s269
      %s272 = sphi 0, %s271
      %s286 = sphi 0, %s272
      %s290 = sphi 0, %s290
      %s292 = sphi 0, %s290
      %s293 = sphi 0, %s292
      %s307 = sphi 0, %s293
      %s311 = sphi 0, %s311
      %s313 = sphi 0, %s311
      %s314 = sphi 0, %s313
      %s328 = sphi 0, %s314
      %s332 = sphi 0, %s332
      %s334 = sphi 0, %s332
      %s335 = sphi 0, %s334
      %s349 = sphi 0, %s335
      %s353 = sphi 0, %s353
      %s355 = sphi 0, %s353
      %s356 = sphi 0, %s355
      %s370 = sphi 0, %s356
      %s376 = sphi 0, %s378
      %s379 = sphi 0, %s376
      %s380 = sphi 0, %s379
      %s396 = sphi 0, %s380
    $region4: #{swin_transformer_1d_block.1} parent=1 // loop_header_branch
      %28 = sbr.rel (%p26) target = $region8
    $region5: #{swin_transformer_1d_block.1} parent=1 // loop_body
      %s30 = ssub.s32 %s25, 1
      %s31 = ssub.s32 %s25, 2
      %s32 = sadd.s32 %s25, 1
      %s33 = ssub.s32 %s25, %s32
      %p34 = scmp.eq.s32.totalorder %s33, 0
      %s36 = sadd.s32 %s35, 1
      %s37 = scalar_select %p34, %s35, %s36
      %p40 = pneg %p34
      %p41 = scmp.eq.s32.totalorder %s25, 1
      %p42 = por %p40, %p41
      %p43 = scmp.ne.s32.totalorder %s35, %s38
      %p44 = scmp.eq.s32.totalorder %s25, 0
      %p45 = por %p43, %p44
      %p46 = scmp.ne.s32.totalorder %s35, %s38
      %p47 = scmp.eq.s32.totalorder %s30, 1
      %p48 = por %p46, %p47
      %p49 = scmp.ne.s32.totalorder %s38, %s39
      %p50 = scmp.eq.s32.totalorder %s30, 0
      %p51 = por %p49, %p50
      %p52 = scmp.ne.s32.totalorder %s38, %s39
      %p53 = scmp.eq.s32.totalorder %s31, 1
      %p54 = por %p52, %p53
      %p56 = scmp.ne.s32.totalorder %s39, %s55
      %p57 = scmp.eq.s32.totalorder %s31, 0
      %p58 = por %p56, %p57
      %s60 = sadd.s32 %s59, 1
      %p63 = scmp.eq.s32.totalorder %s25, 1
      %p64 = scmp.ne.s32.totalorder %s59, %s61
      %p65 = scmp.eq.s32.totalorder %s25, 0
      %p66 = por %p64, %p65
      %p67 = scmp.ne.s32.totalorder %s59, %s61
      %p68 = scmp.eq.s32.totalorder %s30, 1
      %p69 = por %p67, %p68
      %p70 = scmp.ne.s32.totalorder %s61, %s62
      %p71 = scmp.eq.s32.totalorder %s30, 0
      %p72 = por %p70, %p71
      %p73 = scmp.ne.s32.totalorder %s61, %s62
      %p74 = scmp.eq.s32.totalorder %s31, 1
      %p75 = por %p73, %p74
      %p77 = scmp.ne.s32.totalorder %s62, %s76
      %p78 = scmp.eq.s32.totalorder %s31, 0
      %p79 = por %p77, %p78
      %s81 = sadd.s32 %s80, 1
      %p84 = scmp.eq.s32.totalorder %s25, 1
      %p85 = scmp.ne.s32.totalorder %s80, %s82
      %p86 = scmp.eq.s32.totalorder %s25, 0
      %p87 = por %p85, %p86
      %p88 = scmp.ne.s32.totalorder %s80, %s82
      %p89 = scmp.eq.s32.totalorder %s30, 1
      %p90 = por %p88, %p89
      %p91 = scmp.ne.s32.totalorder %s82, %s83
      %p92 = scmp.eq.s32.totalorder %s30, 0
      %p93 = por %p91, %p92
      %p94 = scmp.ne.s32.totalorder %s82, %s83
      %p95 = scmp.eq.s32.totalorder %s31, 1
      %p96 = por %p94, %p95
      %p98 = scmp.ne.s32.totalorder %s83, %s97
      %p99 = scmp.eq.s32.totalorder %s31, 0
      %p100 = por %p98, %p99
      %s102 = sadd.s32 %s101, 1
      %p105 = scmp.eq.s32.totalorder %s25, 1
      %p106 = scmp.ne.s32.totalorder %s101, %s103
      %p107 = scmp.eq.s32.totalorder %s25, 0
      %p108 = por %p106, %p107
      %p109 = scmp.ne.s32.totalorder %s101, %s103
      %p110 = scmp.eq.s32.totalorder %s30, 1
      %p111 = por %p109, %p110
      %p112 = scmp.ne.s32.totalorder %s103, %s104
      %p113 = scmp.eq.s32.totalorder %s30, 0
      %p114 = por %p112, %p113
      %p115 = scmp.ne.s32.totalorder %s103, %s104
      %p116 = scmp.eq.s32.totalorder %s31, 1
      %p117 = por %p115, %p116
      %p119 = scmp.ne.s32.totalorder %s104, %s118
      %p120 = scmp.eq.s32.totalorder %s31, 0
      %p121 = por %p119, %p120
      %s123 = sadd.s32 %s122, 1
      %p126 = scmp.eq.s32.totalorder %s25, 1
      %p127 = scmp.ne.s32.totalorder %s122, %s124
      %p128 = scmp.eq.s32.totalorder %s25, 0
      %p129 = por %p127, %p128
      %p130 = scmp.ne.s32.totalorder %s122, %s124
      %p131 = scmp.eq.s32.totalorder %s30, 1
      %p132 = por %p130, %p131
      %p133 = scmp.ne.s32.totalorder %s124, %s125
      %p134 = scmp.eq.s32.totalorder %s30, 0
      %p135 = por %p133, %p134
      %p136 = scmp.ne.s32.totalorder %s124, %s125
      %p137 = scmp.eq.s32.totalorder %s31, 1
      %p138 = por %p136, %p137
      %p140 = scmp.ne.s32.totalorder %s125, %s139
      %p141 = scmp.eq.s32.totalorder %s31, 0
      %p142 = por %p140, %p141
      %s144 = sadd.s32 %s143, 1
      %p147 = scmp.eq.s32.totalorder %s25, 1
      %p148 = scmp.ne.s32.totalorder %s143, %s145
      %p149 = scmp.eq.s32.totalorder %s25, 0
      %p150 = por %p148, %p149
      %p151 = scmp.ne.s32.totalorder %s143, %s145
      %p152 = scmp.eq.s32.totalorder %s30, 1
      %p153 = por %p151, %p152
      %p154 = scmp.ne.s32.totalorder %s145, %s146
      %p155 = scmp.eq.s32.totalorder %s30, 0
      %p156 = por %p154, %p155
      %p157 = scmp.ne.s32.totalorder %s145, %s146
      %p158 = scmp.eq.s32.totalorder %s31, 1
      %p159 = por %p157, %p158
      %p161 = scmp.ne.s32.totalorder %s146, %s160
      %p162 = scmp.eq.s32.totalorder %s31, 0
      %p163 = por %p161, %p162
      %s165 = sadd.s32 %s164, 1
      %p168 = scmp.eq.s32.totalorder %s25, 1
      %p169 = scmp.ne.s32.totalorder %s164, %s166
      %p170 = scmp.eq.s32.totalorder %s25, 0
      %p171 = por %p169, %p170
      %p172 = scmp.ne.s32.totalorder %s164, %s166
      %p173 = scmp.eq.s32.totalorder %s30, 1
      %p174 = por %p172, %p173
      %p175 = scmp.ne.s32.totalorder %s166, %s167
      %p176 = scmp.eq.s32.totalorder %s30, 0
      %p177 = por %p175, %p176
      %p178 = scmp.ne.s32.totalorder %s166, %s167
      %p179 = scmp.eq.s32.totalorder %s31, 1
      %p180 = por %p178, %p179
      %p182 = scmp.ne.s32.totalorder %s167, %s181
      %p183 = scmp.eq.s32.totalorder %s31, 0
      %p184 = por %p182, %p183
      %s186 = sadd.s32 %s185, 1
      %p189 = scmp.eq.s32.totalorder %s25, 1
      %p190 = scmp.ne.s32.totalorder %s185, %s187
      %p191 = scmp.eq.s32.totalorder %s25, 0
      %p192 = por %p190, %p191
      %p193 = scmp.ne.s32.totalorder %s185, %s187
      %p194 = scmp.eq.s32.totalorder %s30, 1
      %p195 = por %p193, %p194
      %p196 = scmp.ne.s32.totalorder %s187, %s188
      %p197 = scmp.eq.s32.totalorder %s30, 0
      %p198 = por %p196, %p197
      %p199 = scmp.ne.s32.totalorder %s187, %s188
      %p200 = scmp.eq.s32.totalorder %s31, 1
      %p201 = por %p199, %p200
      %p203 = scmp.ne.s32.totalorder %s188, %s202
      %p204 = scmp.eq.s32.totalorder %s31, 0
      %p205 = por %p203, %p204
      %s207 = sadd.s32 %s206, 1
      %p210 = scmp.eq.s32.totalorder %s25, 1
      %p211 = scmp.ne.s32.totalorder %s206, %s208
      %p212 = scmp.eq.s32.totalorder %s25, 0
      %p213 = por %p211, %p212
      %p214 = scmp.ne.s32.totalorder %s206, %s208
      %p215 = scmp.eq.s32.totalorder %s30, 1
      %p216 = por %p214, %p215
      %p217 = scmp.ne.s32.totalorder %s208, %s209
      %p218 = scmp.eq.s32.totalorder %s30, 0
      %p219 = por %p217, %p218
      %p220 = scmp.ne.s32.totalorder %s208, %s209
      %p221 = scmp.eq.s32.totalorder %s31, 1
      %p222 = por %p220, %p221
      %p224 = scmp.ne.s32.totalorder %s209, %s223
      %p225 = scmp.eq.s32.totalorder %s31, 0
      %p226 = por %p224, %p225
      %s228 = sadd.s32 %s227, 1
      %p231 = scmp.eq.s32.totalorder %s25, 1
      %p232 = scmp.ne.s32.totalorder %s227, %s229
      %p233 = scmp.eq.s32.totalorder %s25, 0
      %p234 = por %p232, %p233
      %p235 = scmp.ne.s32.totalorder %s227, %s229
      %p236 = scmp.eq.s32.totalorder %s30, 1
      %p237 = por %p235, %p236
      %p238 = scmp.ne.s32.totalorder %s229, %s230
      %p239 = scmp.eq.s32.totalorder %s30, 0
      %p240 = por %p238, %p239
      %p241 = scmp.ne.s32.totalorder %s229, %s230
      %p242 = scmp.eq.s32.totalorder %s31, 1
      %p243 = por %p241, %p242
      %p245 = scmp.ne.s32.totalorder %s230, %s244
      %p246 = scmp.eq.s32.totalorder %s31, 0
      %p247 = por %p245, %p246
      %s249 = sadd.s32 %s248, 1
      %p252 = scmp.eq.s32.totalorder %s25, 1
      %p253 = scmp.ne.s32.totalorder %s248, %s250
      %p254 = scmp.eq.s32.totalorder %s25, 0
      %p255 = por %p253, %p254
      %p256 = scmp.ne.s32.totalorder %s248, %s250
      %p257 = scmp.eq.s32.totalorder %s30, 1
      %p258 = por %p256, %p257
      %p259 = scmp.ne.s32.totalorder %s250, %s251
      %p260 = scmp.eq.s32.totalorder %s30, 0
      %p261 = por %p259, %p260
      %p262 = scmp.ne.s32.totalorder %s250, %s251
      %p263 = scmp.eq.s32.totalorder %s31, 1
      %p264 = por %p262, %p263
      %p266 = scmp.ne.s32.totalorder %s251, %s265
      %p267 = scmp.eq.s32.totalorder %s31, 0
      %p268 = por %p266, %p267
      %s270 = sadd.s32 %s269, 1
      %p273 = scmp.eq.s32.totalorder %s25, 1
      %p274 = scmp.ne.s32.totalorder %s269, %s271
      %p275 = scmp.eq.s32.totalorder %s25, 0
      %p276 = por %p274, %p275
      %p277 = scmp.ne.s32.totalorder %s269, %s271
      %p278 = scmp.eq.s32.totalorder %s30, 1
      %p279 = por %p277, %p278
      %p280 = scmp.ne.s32.totalorder %s271, %s272
      %p281 = scmp.eq.s32.totalorder %s30, 0
      %p282 = por %p280, %p281
      %p283 = scmp.ne.s32.totalorder %s271, %s272
      %p284 = scmp.eq.s32.totalorder %s31, 1
      %p285 = por %p283, %p284
      %p287 = scmp.ne.s32.totalorder %s272, %s286
      %p288 = scmp.eq.s32.totalorder %s31, 0
      %p289 = por %p287, %p288
      %s291 = sadd.s32 %s290, 1
      %p294 = scmp.eq.s32.totalorder %s25, 1
      %p295 = scmp.ne.s32.totalorder %s290, %s292
      %p296 = scmp.eq.s32.totalorder %s25, 0
      %p297 = por %p295, %p296
      %p298 = scmp.ne.s32.totalorder %s290, %s292
      %p299 = scmp.eq.s32.totalorder %s30, 1
      %p300 = por %p298, %p299
      %p301 = scmp.ne.s32.totalorder %s292, %s293
      %p302 = scmp.eq.s32.totalorder %s30, 0
      %p303 = por %p301, %p302
      %p304 = scmp.ne.s32.totalorder %s292, %s293
      %p305 = scmp.eq.s32.totalorder %s31, 1
      %p306 = por %p304, %p305
      %p308 = scmp.ne.s32.totalorder %s293, %s307
      %p309 = scmp.eq.s32.totalorder %s31, 0
      %p310 = por %p308, %p309
      %s312 = sadd.s32 %s311, 1
      %p315 = scmp.eq.s32.totalorder %s25, 1
      %p316 = scmp.ne.s32.totalorder %s311, %s313
      %p317 = scmp.eq.s32.totalorder %s25, 0
      %p318 = por %p316, %p317
      %p319 = scmp.ne.s32.totalorder %s311, %s313
      %p320 = scmp.eq.s32.totalorder %s30, 1
      %p321 = por %p319, %p320
      %p322 = scmp.ne.s32.totalorder %s313, %s314
      %p323 = scmp.eq.s32.totalorder %s30, 0
      %p324 = por %p322, %p323
      %p325 = scmp.ne.s32.totalorder %s313, %s314
      %p326 = scmp.eq.s32.totalorder %s31, 1
      %p327 = por %p325, %p326
      %p329 = scmp.ne.s32.totalorder %s314, %s328
      %p330 = scmp.eq.s32.totalorder %s31, 0
      %p331 = por %p329, %p330
      %s333 = sadd.s32 %s332, 1
      %p336 = scmp.eq.s32.totalorder %s25, 1
      %p337 = scmp.ne.s32.totalorder %s332, %s334
      %p338 = scmp.eq.s32.totalorder %s25, 0
      %p339 = por %p337, %p338
      %p340 = scmp.ne.s32.totalorder %s332, %s334
      %p341 = scmp.eq.s32.totalorder %s30, 1
      %p342 = por %p340, %p341
      %p343 = scmp.ne.s32.totalorder %s334, %s335
      %p344 = scmp.eq.s32.totalorder %s30, 0
      %p345 = por %p343, %p344
      %p346 = scmp.ne.s32.totalorder %s334, %s335
      %p347 = scmp.eq.s32.totalorder %s31, 1
      %p348 = por %p346, %p347
      %p350 = scmp.ne.s32.totalorder %s335, %s349
      %p351 = scmp.eq.s32.totalorder %s31, 0
      %p352 = por %p350, %p351
      %s354 = sadd.s32 %s353, 1
      %p357 = scmp.eq.s32.totalorder %s25, 1
      %p358 = scmp.ne.s32.totalorder %s353, %s355
      %p359 = scmp.eq.s32.totalorder %s25, 0
      %p360 = por %p358, %p359
      %p361 = scmp.ne.s32.totalorder %s353, %s355
      %p362 = scmp.eq.s32.totalorder %s30, 1
      %p363 = por %p361, %p362
      %p364 = scmp.ne.s32.totalorder %s355, %s356
      %p365 = scmp.eq.s32.totalorder %s30, 0
      %p366 = por %p364, %p365
      %p367 = scmp.ne.s32.totalorder %s355, %s356
      %p368 = scmp.eq.s32.totalorder %s31, 1
      %p369 = por %p367, %p368
      %p371 = scmp.ne.s32.totalorder %s356, %s370
      %p372 = scmp.eq.s32.totalorder %s31, 0
      %p373 = por %p371, %p372
      %s374 = ssub.s32 %s25, %s32
      %p375 = scmp.eq.s32.totalorder %s374, 0
      %s377 = sadd.s32 %s376, 1
      %s378 = scalar_select %p375, %s376, %s377
      %p381 = pneg %p375
      %p382 = scmp.eq.s32.totalorder %s25, 1
      %p383 = por %p381, %p382
      %p384 = scmp.ne.s32.totalorder %s376, %s379
      %p385 = scmp.eq.s32.totalorder %s25, 0
      %p386 = por %p384, %p385
      %p387 = scmp.ne.s32.totalorder %s376, %s379
      %p388 = scmp.eq.s32.totalorder %s30, 1
      %p389 = por %p387, %p388
      %p390 = scmp.ne.s32.totalorder %s379, %s380
      %p391 = scmp.eq.s32.totalorder %s30, 0
      %p392 = por %p390, %p391
      %p393 = scmp.ne.s32.totalorder %s379, %s380
      %p394 = scmp.eq.s32.totalorder %s31, 1
      %p395 = por %p393, %p394
      %p397 = scmp.ne.s32.totalorder %s380, %s396
      %p398 = scmp.eq.s32.totalorder %s31, 0
      %p399 = por %p397, %p398
      %p400 = scmp.le.s32.totalorder 1, %s25
      %p401 = scmp.lt.s32.totalorder %s25, 3
      %p402 = pnand %p400, %p401
      %p403 = pneg %p402
      // Predicated region
      $region9: #{swin_transformer_1d_block.1} parent=5 // pred_check
        _
      $region10: #{swin_transformer_1d_block.1} parent=5 // pred_check_branch
        %405 = sbr.rel (%p402) target = $region12
      $region11: #{swin_transformer_1d_block.1} parent=5 // pred_region
        %s406 = ssub.s32 %s25, 1
        // Predicated region
        $region13: #{swin_transformer_1d_block.1} parent=11 // pred_check
          %p407 = pneg %p72
        $region14: #{swin_transformer_1d_block.1} parent=11 // pred_check_branch
          %409 = sbr.rel (%p407) target = $region16
        $region15: #{swin_transformer_1d_block.1} parent=11 // pred_region
          _
        $region16: #{swin_transformer_1d_block.1} parent=11 // pred_fallthru
          _
        // Predicated region
        $region17: #{swin_transformer_1d_block.1} parent=11 // pred_check
          %p410 = pneg %p93
        $region18: #{swin_transformer_1d_block.1} parent=11 // pred_check_branch
          %412 = sbr.rel (%p410) target = $region20
        $region19: #{swin_transformer_1d_block.1} parent=11 // pred_region
          _
        $region20: #{swin_transformer_1d_block.1} parent=11 // pred_fallthru
          _
        // Predicated region
        $region21: #{swin_transformer_1d_block.1} parent=11 // pred_check
          %p413 = pneg %p114
        $region22: #{swin_transformer_1d_block.1} parent=11 // pred_check_branch
          %415 = sbr.rel (%p413) target = $region24
        $region23: #{swin_transformer_1d_block.1} parent=11 // pred_region
          _
        $region24: #{swin_transformer_1d_block.1} parent=11 // pred_fallthru
          _
        // Predicated region
        $region25: #{swin_transformer_1d_block.1} parent=11 // pred_check
          %p416 = pneg %p135
        $region26: #{swin_transformer_1d_block.1} parent=11 // pred_check_branch
          %418 = sbr.rel (%p416) target = $region28
        $region27: #{swin_transformer_1d_block.1} parent=11 // pred_region
          _
        $region28: #{swin_transformer_1d_block.1} parent=11 // pred_fallthru
          _
        // Predicated region
        $region29: #{swin_transformer_1d_block.1} parent=11 // pred_check
          %p419 = pneg %p156
        $region30: #{swin_transformer_1d_block.1} parent=11 // pred_check_branch
          %421 = sbr.rel (%p419) target = $region32
        $region31: #{swin_transformer_1d_block.1} parent=11 // pred_region
          _
        $region32: #{swin_transformer_1d_block.1} parent=11 // pred_fallthru
          _
        // Predicated region
        $region33: #{swin_transformer_1d_block.1} parent=11 // pred_check
          %p422 = pneg %p177
        $region34: #{swin_transformer_1d_block.1} parent=11 // pred_check_branch
          %424 = sbr.rel (%p422) target = $region36
        $region35: #{swin_transformer_1d_block.1} parent=11 // pred_region
          _
        $region36: #{swin_transformer_1d_block.1} parent=11 // pred_fallthru
          _
        // Predicated region
        $region37: #{swin_transformer_1d_block.1} parent=11 // pred_check
          %p425 = pneg %p198
        $region38: #{swin_transformer_1d_block.1} parent=11 // pred_check_branch
          %427 = sbr.rel (%p425) target = $region40
        $region39: #{swin_transformer_1d_block.1} parent=11 // pred_region
          _
        $region40: #{swin_transformer_1d_block.1} parent=11 // pred_fallthru
          _
        // Predicated region
        $region41: #{swin_transformer_1d_block.1} parent=11 // pred_check
          %p428 = pneg %p219
        $region42: #{swin_transformer_1d_block.1} parent=11 // pred_check_branch
          %430 = sbr.rel (%p428) target = $region44
        $region43: #{swin_transformer_1d_block.1} parent=11 // pred_region
          _
        $region44: #{swin_transformer_1d_block.1} parent=11 // pred_fallthru
          _
        // Predicated region
        $region45: #{swin_transformer_1d_block.1} parent=11 // pred_check
          %p431 = pneg %p240
        $region46: #{swin_transformer_1d_block.1} parent=11 // pred_check_branch
          %433 = sbr.rel (%p431) target = $region48
        $region47: #{swin_transformer_1d_block.1} parent=11 // pred_region
          _
        $region48: #{swin_transformer_1d_block.1} parent=11 // pred_fallthru
          _
        // Predicated region
        $region49: #{swin_transformer_1d_block.1} parent=11 // pred_check
          %p434 = pneg %p261
        $region50: #{swin_transformer_1d_block.1} parent=11 // pred_check_branch
          %436 = sbr.rel (%p434) target = $region52
        $region51: #{swin_transformer_1d_block.1} parent=11 // pred_region
          _
        $region52: #{swin_transformer_1d_block.1} parent=11 // pred_fallthru
          _
        // Predicated region
        $region53: #{swin_transformer_1d_block.1} parent=11 // pred_check
          %p437 = pneg %p282
        $region54: #{swin_transformer_1d_block.1} parent=11 // pred_check_branch
          %439 = sbr.rel (%p437) target = $region56
        $region55: #{swin_transformer_1d_block.1} parent=11 // pred_region
          _
        $region56: #{swin_transformer_1d_block.1} parent=11 // pred_fallthru
          _
        // Predicated region
        $region57: #{swin_transformer_1d_block.1} parent=11 // pred_check
          %p440 = pneg %p303
        $region58: #{swin_transformer_1d_block.1} parent=11 // pred_check_branch
          %442 = sbr.rel (%p440) target = $region60
        $region59: #{swin_transformer_1d_block.1} parent=11 // pred_region
          _
        $region60: #{swin_transformer_1d_block.1} parent=11 // pred_fallthru
          _
        // Predicated region
        $region61: #{swin_transformer_1d_block.1} parent=11 // pred_check
          %p443 = pneg %p324
        $region62: #{swin_transformer_1d_block.1} parent=11 // pred_check_branch
          %445 = sbr.rel (%p443) target = $region64
        $region63: #{swin_transformer_1d_block.1} parent=11 // pred_region
          _
        $region64: #{swin_transformer_1d_block.1} parent=11 // pred_fallthru
          _
        // Predicated region
        $region65: #{swin_transformer_1d_block.1} parent=11 // pred_check
          %p446 = pneg %p345
        $region66: #{swin_transformer_1d_block.1} parent=11 // pred_check_branch
          %448 = sbr.rel (%p446) target = $region68
        $region67: #{swin_transformer_1d_block.1} parent=11 // pred_region
          _
        $region68: #{swin_transformer_1d_block.1} parent=11 // pred_fallthru
          _
        // Predicated region
        $region69: #{swin_transformer_1d_block.1} parent=11 // pred_check
          %p449 = pneg %p366
        $region70: #{swin_transformer_1d_block.1} parent=11 // pred_check_branch
          %451 = sbr.rel (%p449) target = $region72
        $region71: #{swin_transformer_1d_block.1} parent=11 // pred_region
          _
        $region72: #{swin_transformer_1d_block.1} parent=11 // pred_fallthru
          _
      $region12: #{swin_transformer_1d_block.1} parent=5 // pred_fallthru
        _
      %p452 = scmp.lt.s32.totalorder %s25, 2
      // Predicated region
      $region73: #{swin_transformer_1d_block.1} parent=5 // pred_check
        %p453 = pneg %p452
      $region74: #{swin_transformer_1d_block.1} parent=5 // pred_check_branch
        %455 = sbr.rel (%p453) target = $region76
      $region75: #{swin_transformer_1d_block.1} parent=5 // pred_region
        // Predicated region
        $region77: #{swin_transformer_1d_block.1} parent=75 // pred_check
          %p456 = pneg %p45
        $region78: #{swin_transformer_1d_block.1} parent=75 // pred_check_branch
          %458 = sbr.rel (%p456) target = $region80
        $region79: #{swin_transformer_1d_block.1} parent=75 // pred_region
          %p459 = scmp.lt.s32.totalorder %s25, 1
          %s460 = scalar_select %p459, %s25, 1
          %s461 = smul.addr %s460, 2
          %s462 = smul.addr %s461, 8
          %s463 = scalar_lea.vmem %s0, %s462
        $region80: #{swin_transformer_1d_block.1} parent=75 // pred_fallthru
          _
      $region76: #{swin_transformer_1d_block.1} parent=5 // pred_fallthru
        _
      %p464 = scmp.le.s32.totalorder 1, %s25
      %p465 = scmp.lt.s32.totalorder %s25, 3
      %p466 = pnand %p464, %p465
      %p467 = pneg %p466
      // Predicated region
      $region81: #{swin_transformer_1d_block.1} parent=5 // pred_check
        _
      $region82: #{swin_transformer_1d_block.1} parent=5 // pred_check_branch
        %469 = sbr.rel (%p466) target = $region84
      $region83: #{swin_transformer_1d_block.1} parent=5 // pred_region
        %s470 = ssub.s32 %s25, 1
        %p471 = scmp.lt.s32.totalorder %s30, 1
        %s472 = scalar_select %p471, %s30, 1
        %s473 = smul.addr %s472, 2
        %s474 = smul.addr %s473, 8
        %s475 = scalar_lea.vmem %s0, %s474
        %p476 = pneg %p51
        %p477 = pneg %p48
        %p478 = pneg %p72
        %p479 = pneg %p69
        %p480 = pneg %p93
        %p481 = pneg %p90
        %p482 = pneg %p114
        %p483 = pneg %p111
        %p484 = pneg %p135
        %p485 = pneg %p132
        %p486 = pneg %p156
        %p487 = pneg %p153
        %p488 = pneg %p177
        %p489 = pneg %p174
        %p490 = pneg %p198
        %p491 = pneg %p195
        %p492 = pneg %p219
        %p493 = pneg %p216
        %p494 = pneg %p240
        %p495 = pneg %p237
        %p496 = pneg %p261
        %p497 = pneg %p258
        %p498 = pneg %p282
        %p499 = pneg %p279
        %p500 = pneg %p303
        %p501 = pneg %p300
        %p502 = pneg %p324
        %p503 = pneg %p321
        %p504 = pneg %p345
        %p505 = pneg %p342
        %p506 = pneg %p366
        %p507 = pneg %p363
        %p508 = pneg %p392
        %p509 = pneg %p389
        %s510 = sand.u32 %s379, 1
        %s511 = scalar_lea.sflag [#allocation3], %s510
        %s512 = sand.u32 %s379, 1
        %s513 = smul.addr %s512, 16
        %s514 = scalar_lea.vmem [#allocation2], %s513
        %p515 = scmp.lt.s32.totalorder %s30, 1
        %s516 = scalar_select %p515, %s30, 1
        %s517 = smul.addr %s516, 2
        %s518 = smul.addr %s517, 8
        %s519 = scalar_lea.vmem %s0, %s518
        %v521 = vld [vmem:[%s519] sm:$0xff]
        %v522 = vld [vmem:[%s519 + $0x8] sm:$0xff]
        %v523 = vpack.c.bf16 %v522, %v521
        %v524 = vld [vmem:[%s1] sm:$0xf]
        %v525 = vld [vmem:[%s1 + $0x4] sm:$0xf]
        %v526 = vld [vmem:[%s1 + $0x8] sm:$0xf]
        %v527 = vld [vmem:[%s1 + $0xc] sm:$0xf]
        %v528 = vld [vmem:[%s4] sm:$0x1]
        %v530 = vlaneseq
        %v531 = vshrl.u32 %v530, 7
        %v532 = vsub.s32 0, %v531
        %v533 = vrot.slane %v528, %v532
        %v539 = vunpack.c.l.b16 %v524
        %v540 = vunpack.c.l.b16 %v525
        %v541 = vunpack.c.l.b16 %v526
        %v542 = vunpack.c.l.b16 %v527
        %v543 = vpack.c.b16 %v540, %v539
        %v544 = vpack.c.b16 %v542, %v541
        %vm547 = vcmask 261120
        %v549 = vsel %vm547, %v523, 0
        %551 = vmatprep.subr.bf16.mxu0 0
        %552 = vmatpush1.bf16.msra.mxu0 %v543
        %553 = vmatprep.subr.bf16.mxu0 0
        %554 = vmatpush1.bf16.msra.mxu0 %v544
        %555 = vmatprep.subr.bf16.mxu0 0
        %556 = vmatpush1.bf16.msra.mxu0 0
        %557 = vmatprep.subr.bf16.mxu0 0
        %558 = vmatpush1.bf16.msra.mxu0 0
        %559 = vmatprep.subr.bf16.mxu0 0
        %560 = vmatpush1.bf16.msra.mxu0 0
        %561 = vmatprep.subr.bf16.mxu0 0
        %562 = vmatpush1.bf16.msra.mxu0 0
        %563 = vmatprep.subr.bf16.mxu0 0
        %564 = vmatpush1.bf16.msra.mxu0 0
        %565 = vmatprep.subr.bf16.mxu0 0
        %566 = vmatpush1.bf16.msra.mxu0 0
        %567 = vmatprep.subr.bf16.mxu0 0
        %568 = vmatpush1.bf16.msra.mxu0 0
        %569 = vmatprep.subr.bf16.mxu0 0
        %570 = vmatpush1.bf16.msra.mxu0 0
        %571 = vmatprep.subr.bf16.mxu0 0
        %572 = vmatpush1.bf16.msra.mxu0 0
        %573 = vmatprep.subr.bf16.mxu0 0
        %574 = vmatpush1.bf16.msra.mxu0 0
        %575 = vmatprep.subr.bf16.mxu0 0
        %576 = vmatpush1.bf16.msra.mxu0 0
        %577 = vmatprep.subr.bf16.mxu0 0
        %578 = vmatpush1.bf16.msra.mxu0 0
        %579 = vmatprep.subr.bf16.mxu0 0
        %580 = vmatpush1.bf16.msra.mxu0 0
        %581 = vmatprep.subr.bf16.mxu0 0
        %582 = vmatpush1.bf16.msra.mxu0 0
        %583 = vmatprep.mubr.bf16.mxu0 0
        %584 = vmatmul.mubr.bf16.gmra.mrb[0].mxu0 %v549
        %v585 = vpop.f32.mrb[0].mxu0
        %v586 = vadd.f32 %v533, %v585
        %v587 = vpop.f32.mrb[0].mxu0
        %v588 = vpop.f32.mrb[0].mxu0
        %v589 = vadd.f32 %v533, %v588
        %v590 = vpop.f32.mrb[0].mxu0
        %591 = vdwg.mxu0
        %v592 = vld [vmem:[%s2] sm:$0xf]
        %v593 = vld [vmem:[%s2 + $0x4] sm:$0xf]
        %v594 = vld [vmem:[%s2 + $0x8] sm:$0xf]
        %v595 = vld [vmem:[%s2 + $0xc] sm:$0xf]
        %v600 = vunpack.c.l.b16 %v592
        %v601 = vunpack.c.l.b16 %v593
        %v602 = vunpack.c.l.b16 %v594
        %v603 = vunpack.c.l.b16 %v595
        %v604 = vpack.c.b16 %v601, %v600
        %v605 = vpack.c.b16 %v603, %v602
        %608 = vmatprep.subr.bf16.mxu0 0
        %609 = vmatpush1.bf16.msra.mxu0 %v604
        %610 = vmatprep.subr.bf16.mxu0 0
        %611 = vmatpush1.bf16.msra.mxu0 %v605
        %612 = vmatprep.subr.bf16.mxu0 0
        %613 = vmatpush1.bf16.msra.mxu0 0
        %614 = vmatprep.subr.bf16.mxu0 0
        %615 = vmatpush1.bf16.msra.mxu0 0
        %616 = vmatprep.subr.bf16.mxu0 0
        %617 = vmatpush1.bf16.msra.mxu0 0
        %618 = vmatprep.subr.bf16.mxu0 0
        %619 = vmatpush1.bf16.msra.mxu0 0
        %620 = vmatprep.subr.bf16.mxu0 0
        %621 = vmatpush1.bf16.msra.mxu0 0
        %622 = vmatprep.subr.bf16.mxu0 0
        %623 = vmatpush1.bf16.msra.mxu0 0
        %624 = vmatprep.subr.bf16.mxu0 0
        %625 = vmatpush1.bf16.msra.mxu0 0
        %626 = vmatprep.subr.bf16.mxu0 0
        %627 = vmatpush1.bf16.msra.mxu0 0
        %628 = vmatprep.subr.bf16.mxu0 0
        %629 = vmatpush1.bf16.msra.mxu0 0
        %630 = vmatprep.subr.bf16.mxu0 0
        %631 = vmatpush1.bf16.msra.mxu0 0
        %632 = vmatprep.subr.bf16.mxu0 0
        %633 = vmatpush1.bf16.msra.mxu0 0
        %634 = vmatprep.subr.bf16.mxu0 0
        %635 = vmatpush1.bf16.msra.mxu0 0
        %636 = vmatprep.subr.bf16.mxu0 0
        %637 = vmatpush1.bf16.msra.mxu0 0
        %638 = vmatprep.subr.bf16.mxu0 0
        %639 = vmatpush1.bf16.msra.mxu0 0
        %640 = vmatprep.mubr.bf16.mxu0 0
        %641 = vmatmul.mubr.bf16.gmra.mrb[0].mxu0 %v549
        %v642 = vpop.f32.mrb[0].mxu0
        %v643 = vadd.f32 0.0, %v642
        %v644 = vpop.f32.mrb[0].mxu0
        %v645 = vpop.f32.mrb[0].mxu0
        %v646 = vadd.f32 0.0, %v645
        %v647 = vpop.f32.mrb[0].mxu0
        %648 = vdwg.mxu0
        %v649 = vld [vmem:[%s3] sm:$0xf]
        %v650 = vld [vmem:[%s3 + $0x4] sm:$0xf]
        %v651 = vld [vmem:[%s3 + $0x8] sm:$0xf]
        %v652 = vld [vmem:[%s3 + $0xc] sm:$0xf]
        %v653 = vld [vmem:[%s5] sm:$0x1]
        %v655 = vlaneseq
        %v656 = vshrl.u32 %v655, 7
        %v657 = vsub.s32 0, %v656
        %v658 = vrot.slane %v653, %v657
        %v664 = vunpack.c.l.b16 %v649
        %v665 = vunpack.c.l.b16 %v650
        %v666 = vunpack.c.l.b16 %v651
        %v667 = vunpack.c.l.b16 %v652
        %v668 = vpack.c.b16 %v665, %v664
        %v669 = vpack.c.b16 %v667, %v666
        %672 = vmatprep.subr.bf16.mxu0 0
        %673 = vmatpush1.bf16.msra.mxu0 %v668
        %674 = vmatprep.subr.bf16.mxu0 0
        %675 = vmatpush1.bf16.msra.mxu0 %v669
        %676 = vmatprep.subr.bf16.mxu0 0
        %677 = vmatpush1.bf16.msra.mxu0 0
        %678 = vmatprep.subr.bf16.mxu0 0
        %679 = vmatpush1.bf16.msra.mxu0 0
        %680 = vmatprep.subr.bf16.mxu0 0
        %681 = vmatpush1.bf16.msra.mxu0 0
        %682 = vmatprep.subr.bf16.mxu0 0
        %683 = vmatpush1.bf16.msra.mxu0 0
        %684 = vmatprep.subr.bf16.mxu0 0
        %685 = vmatpush1.bf16.msra.mxu0 0
        %686 = vmatprep.subr.bf16.mxu0 0
        %687 = vmatpush1.bf16.msra.mxu0 0
        %688 = vmatprep.subr.bf16.mxu0 0
        %689 = vmatpush1.bf16.msra.mxu0 0
        %690 = vmatprep.subr.bf16.mxu0 0
        %691 = vmatpush1.bf16.msra.mxu0 0
        %692 = vmatprep.subr.bf16.mxu0 0
        %693 = vmatpush1.bf16.msra.mxu0 0
        %694 = vmatprep.subr.bf16.mxu0 0
        %695 = vmatpush1.bf16.msra.mxu0 0
        %696 = vmatprep.subr.bf16.mxu0 0
        %697 = vmatpush1.bf16.msra.mxu0 0
        %698 = vmatprep.subr.bf16.mxu0 0
        %699 = vmatpush1.bf16.msra.mxu0 0
        %700 = vmatprep.subr.bf16.mxu0 0
        %701 = vmatpush1.bf16.msra.mxu0 0
        %702 = vmatprep.subr.bf16.mxu0 0
        %703 = vmatpush1.bf16.msra.mxu0 0
        %704 = vmatprep.mubr.bf16.mxu0 0
        %705 = vmatmul.mubr.bf16.gmra.mrb[0].mxu0 %v549
        %v706 = vpop.f32.mrb[0].mxu0
        %v707 = vadd.f32 %v658, %v706
        %v708 = vpop.f32.mrb[0].mxu0
        %v709 = vpop.f32.mrb[0].mxu0
        %v710 = vadd.f32 %v658, %v709
        %v711 = vpop.f32.mrb[0].mxu0
        %712 = vdwg.mxu0
        %v713 = vpack.c.bf16 %v589, %v586
        %v714 = vpack.c.bf16 %v646, %v643
        %v715 = vpack.c.bf16 %v710, %v707
        %vm716 = vcmask 64512
        %v718 = vsel %vm716, %v713, 0
        %v721 = vsel %vm716, %v714, 0
        %723 = vmatprep.subr.bf16.mxu0 0
        %724 = vmatpush1.bf16.xpose.msra.mxu0 %v721
        %725 = vmatprep.subr.bf16.mxu0 0
        %726 = vmatpush1.bf16.xpose.msra.mxu0 0
        %727 = vmatprep.subr.bf16.mxu0 0
        %728 = vmatpush1.bf16.xpose.msra.mxu0 0
        %729 = vmatprep.subr.bf16.mxu0 0
        %730 = vmatpush1.bf16.xpose.msra.mxu0 0
        %731 = vmatprep.subr.bf16.mxu0 0
        %732 = vmatpush1.bf16.xpose.msra.mxu0 0
        %733 = vmatprep.subr.bf16.mxu0 0
        %734 = vmatpush1.bf16.xpose.msra.mxu0 0
        %735 = vmatprep.subr.bf16.mxu0 0
        %736 = vmatpush1.bf16.xpose.msra.mxu0 0
        %737 = vmatprep.subr.bf16.mxu0 0
        %738 = vmatpush1.bf16.xpose.msra.mxu0 0
        %739 = vmatprep.subr.bf16.mxu0 0
        %740 = vmatpush1.bf16.xpose.msra.mxu0 0
        %741 = vmatprep.subr.bf16.mxu0 0
        %742 = vmatpush1.bf16.xpose.msra.mxu0 0
        %743 = vmatprep.subr.bf16.mxu0 0
        %744 = vmatpush1.bf16.xpose.msra.mxu0 0
        %745 = vmatprep.subr.bf16.mxu0 0
        %746 = vmatpush1.bf16.xpose.msra.mxu0 0
        %747 = vmatprep.subr.bf16.mxu0 0
        %748 = vmatpush1.bf16.xpose.msra.mxu0 0
        %749 = vmatprep.subr.bf16.mxu0 0
        %750 = vmatpush1.bf16.xpose.msra.mxu0 0
        %751 = vmatprep.subr.bf16.mxu0 0
        %752 = vmatpush1.bf16.xpose.msra.mxu0 0
        %753 = vmatprep.subr.bf16.mxu0 0
        %754 = vmatpush1.bf16.xpose.msra.mxu0 0
        %755 = vmatprep.mubr.bf16.mxu0 0
        %756 = vmatmul.mubr.bf16.gmra.mrb[0].mxu0 %v718
        %v757 = vpop.f32.mrb[0].mxu0
        %v758 = vadd.f32 0.0, %v757
        %v759 = vpop.f32.mrb[0].mxu0
        %v760 = vpop.f32.mrb[0].mxu0
        %v761 = vadd.f32 0.0, %v760
        %v762 = vpop.f32.mrb[0].mxu0
        %763 = vdwg.mxu0
        %765 = vrot.lane.b32.xlu0 %v713, 120
        %v766 = vpop.permute.xlu0 %765
        %768 = vrot.lane.b32.xlu0 %v714, 120
        %v769 = vpop.permute.xlu0 %768
        %v771 = vsel %vm716, %v766, 0
        %v774 = vsel %vm716, %v769, 0
        %776 = vmatprep.subr.bf16.mxu0 0
        %777 = vmatpush1.bf16.xpose.msra.mxu0 %v774
        %778 = vmatprep.subr.bf16.mxu0 0
        %779 = vmatpush1.bf16.xpose.msra.mxu0 0
        %780 = vmatprep.subr.bf16.mxu0 0
        %781 = vmatpush1.bf16.xpose.msra.mxu0 0
        %782 = vmatprep.subr.bf16.mxu0 0
        %783 = vmatpush1.bf16.xpose.msra.mxu0 0
        %784 = vmatprep.subr.bf16.mxu0 0
        %785 = vmatpush1.bf16.xpose.msra.mxu0 0
        %786 = vmatprep.subr.bf16.mxu0 0
        %787 = vmatpush1.bf16.xpose.msra.mxu0 0
        %788 = vmatprep.subr.bf16.mxu0 0
        %789 = vmatpush1.bf16.xpose.msra.mxu0 0
        %790 = vmatprep.subr.bf16.mxu0 0
        %791 = vmatpush1.bf16.xpose.msra.mxu0 0
        %792 = vmatprep.subr.bf16.mxu0 0
        %793 = vmatpush1.bf16.xpose.msra.mxu0 0
        %794 = vmatprep.subr.bf16.mxu0 0
        %795 = vmatpush1.bf16.xpose.msra.mxu0 0
        %796 = vmatprep.subr.bf16.mxu0 0
        %797 = vmatpush1.bf16.xpose.msra.mxu0 0
        %798 = vmatprep.subr.bf16.mxu0 0
        %799 = vmatpush1.bf16.xpose.msra.mxu0 0
        %800 = vmatprep.subr.bf16.mxu0 0
        %801 = vmatpush1.bf16.xpose.msra.mxu0 0
        %802 = vmatprep.subr.bf16.mxu0 0
        %803 = vmatpush1.bf16.xpose.msra.mxu0 0
        %804 = vmatprep.subr.bf16.mxu0 0
        %805 = vmatpush1.bf16.xpose.msra.mxu0 0
        %806 = vmatprep.subr.bf16.mxu0 0
        %807 = vmatpush1.bf16.xpose.msra.mxu0 0
        %808 = vmatprep.mubr.bf16.mxu0 0
        %809 = vmatmul.mubr.bf16.gmra.mrb[0].mxu0 %v771
        %v810 = vpop.f32.mrb[0].mxu0
        %v811 = vadd.f32 0.0, %v810
        %v812 = vpop.f32.mrb[0].mxu0
        %v813 = vpop.f32.mrb[0].mxu0
        %v814 = vadd.f32 0.0, %v813
        %v815 = vpop.f32.mrb[0].mxu0
        %816 = vdwg.mxu0
        %817 = vrot.lane.b32.xlu0 %v713, 112
        %v818 = vpop.permute.xlu0 %817
        %819 = vrot.lane.b32.xlu0 %v714, 112
        %v820 = vpop.permute.xlu0 %819
        %v822 = vsel %vm716, %v818, 0
        %v825 = vsel %vm716, %v820, 0
        %827 = vmatprep.subr.bf16.mxu0 0
        %828 = vmatpush1.bf16.xpose.msra.mxu0 %v825
        %829 = vmatprep.subr.bf16.mxu0 0
        %830 = vmatpush1.bf16.xpose.msra.mxu0 0
        %831 = vmatprep.subr.bf16.mxu0 0
        %832 = vmatpush1.bf16.xpose.msra.mxu0 0
        %833 = vmatprep.subr.bf16.mxu0 0
        %834 = vmatpush1.bf16.xpose.msra.mxu0 0
        %835 = vmatprep.subr.bf16.mxu0 0
        %836 = vmatpush1.bf16.xpose.msra.mxu0 0
        %837 = vmatprep.subr.bf16.mxu0 0
        %838 = vmatpush1.bf16.xpose.msra.mxu0 0
        %839 = vmatprep.subr.bf16.mxu0 0
        %840 = vmatpush1.bf16.xpose.msra.mxu0 0
        %841 = vmatprep.subr.bf16.mxu0 0
        %842 = vmatpush1.bf16.xpose.msra.mxu0 0
        %843 = vmatprep.subr.bf16.mxu0 0
        %844 = vmatpush1.bf16.xpose.msra.mxu0 0
        %845 = vmatprep.subr.bf16.mxu0 0
        %846 = vmatpush1.bf16.xpose.msra.mxu0 0
        %847 = vmatprep.subr.bf16.mxu0 0
        %848 = vmatpush1.bf16.xpose.msra.mxu0 0
        %849 = vmatprep.subr.bf16.mxu0 0
        %850 = vmatpush1.bf16.xpose.msra.mxu0 0
        %851 = vmatprep.subr.bf16.mxu0 0
        %852 = vmatpush1.bf16.xpose.msra.mxu0 0
        %853 = vmatprep.subr.bf16.mxu0 0
        %854 = vmatpush1.bf16.xpose.msra.mxu0 0
        %855 = vmatprep.subr.bf16.mxu0 0
        %856 = vmatpush1.bf16.xpose.msra.mxu0 0
        %857 = vmatprep.subr.bf16.mxu0 0
        %858 = vmatpush1.bf16.xpose.msra.mxu0 0
        %859 = vmatprep.mubr.bf16.mxu0 0
        %860 = vmatmul.mubr.bf16.gmra.mrb[0].mxu0 %v822
        %v861 = vpop.f32.mrb[0].mxu0
        %v862 = vadd.f32 0.0, %v861
        %v863 = vpop.f32.mrb[0].mxu0
        %v864 = vpop.f32.mrb[0].mxu0
        %v865 = vadd.f32 0.0, %v864
        %v866 = vpop.f32.mrb[0].mxu0
        %867 = vdwg.mxu0
        %868 = vrot.lane.b32.xlu0 %v713, 104
        %v869 = vpop.permute.xlu0 %868
        %870 = vrot.lane.b32.xlu0 %v714, 104
        %v871 = vpop.permute.xlu0 %870
        %v873 = vsel %vm716, %v869, 0
        %v876 = vsel %vm716, %v871, 0
        %878 = vmatprep.subr.bf16.mxu0 0
        %879 = vmatpush1.bf16.xpose.msra.mxu0 %v876
        %880 = vmatprep.subr.bf16.mxu0 0
        %881 = vmatpush1.bf16.xpose.msra.mxu0 0
        %882 = vmatprep.subr.bf16.mxu0 0
        %883 = vmatpush1.bf16.xpose.msra.mxu0 0
        %884 = vmatprep.subr.bf16.mxu0 0
        %885 = vmatpush1.bf16.xpose.msra.mxu0 0
        %886 = vmatprep.subr.bf16.mxu0 0
        %887 = vmatpush1.bf16.xpose.msra.mxu0 0
        %888 = vmatprep.subr.bf16.mxu0 0
        %889 = vmatpush1.bf16.xpose.msra.mxu0 0
        %890 = vmatprep.subr.bf16.mxu0 0
        %891 = vmatpush1.bf16.xpose.msra.mxu0 0
        %892 = vmatprep.subr.bf16.mxu0 0
        %893 = vmatpush1.bf16.xpose.msra.mxu0 0
        %894 = vmatprep.subr.bf16.mxu0 0
        %895 = vmatpush1.bf16.xpose.msra.mxu0 0
        %896 = vmatprep.subr.bf16.mxu0 0
        %897 = vmatpush1.bf16.xpose.msra.mxu0 0
        %898 = vmatprep.subr.bf16.mxu0 0
        %899 = vmatpush1.bf16.xpose.msra.mxu0 0
        %900 = vmatprep.subr.bf16.mxu0 0
        %901 = vmatpush1.bf16.xpose.msra.mxu0 0
        %902 = vmatprep.subr.bf16.mxu0 0
        %903 = vmatpush1.bf16.xpose.msra.mxu0 0
        %904 = vmatprep.subr.bf16.mxu0 0
        %905 = vmatpush1.bf16.xpose.msra.mxu0 0
        %906 = vmatprep.subr.bf16.mxu0 0
        %907 = vmatpush1.bf16.xpose.msra.mxu0 0
        %908 = vmatprep.subr.bf16.mxu0 0
        %909 = vmatpush1.bf16.xpose.msra.mxu0 0
        %910 = vmatprep.mubr.bf16.mxu0 0
        %911 = vmatmul.mubr.bf16.gmra.mrb[0].mxu0 %v873
        %v912 = vpop.f32.mrb[0].mxu0
        %v913 = vadd.f32 0.0, %v912
        %v914 = vpop.f32.mrb[0].mxu0
        %v915 = vpop.f32.mrb[0].mxu0
        %v916 = vadd.f32 0.0, %v915
        %v917 = vpop.f32.mrb[0].mxu0
        %918 = vdwg.mxu0
        %vm919 = vcmask 130048
        %v920 = vsel %vm919, %v758, -inf
        %921 = vmax.xlane.f32.xlu0 %v920
        %v922 = vpop.xlane.xlu0 %921
        %v923 = vsel %vm919, %v761, -inf
        %924 = vmax.xlane.f32.xlu0 %v923
        %v925 = vpop.xlane.xlu0 %924
        %v926 = vsel %vm919, %v811, -inf
        %927 = vmax.xlane.f32.xlu0 %v926
        %v928 = vpop.xlane.xlu0 %927
        %v929 = vsel %vm919, %v814, -inf
        %930 = vmax.xlane.f32.xlu0 %v929
        %v931 = vpop.xlane.xlu0 %930
        %v932 = vsel %vm919, %v862, -inf
        %933 = vmax.xlane.f32.xlu0 %v932
        %v934 = vpop.xlane.xlu0 %933
        %v935 = vsel %vm919, %v865, -inf
        %936 = vmax.xlane.f32.xlu0 %v935
        %v937 = vpop.xlane.xlu0 %936
        %v938 = vsel %vm919, %v913, -inf
        %939 = vmax.xlane.f32.xlu0 %v938
        %v940 = vpop.xlane.xlu0 %939
        %v941 = vsel %vm919, %v916, -inf
        %942 = vmax.xlane.f32.xlu0 %v941
        %v943 = vpop.xlane.xlu0 %942
        %v944 = vsub.f32 %v758, %v922
        %v945 = vsub.f32 %v761, %v925
        %v946 = vsub.f32 %v811, %v928
        %v947 = vsub.f32 %v814, %v931
        %v948 = vsub.f32 %v862, %v934
        %v949 = vsub.f32 %v865, %v937
        %v950 = vsub.f32 %v913, %v940
        %v951 = vsub.f32 %v916, %v943
        %v952 = vmul.f32 %v944, 1.442695
        %v953 = vpow.pop %v952
        %v954 = vmul.f32 %v945, 1.442695
        %v955 = vpow.pop %v954
        %v956 = vmul.f32 %v946, 1.442695
        %v957 = vpow.pop %v956
        %v958 = vmul.f32 %v947, 1.442695
        %v959 = vpow.pop %v958
        %v960 = vmul.f32 %v948, 1.442695
        %v961 = vpow.pop %v960
        %v962 = vmul.f32 %v949, 1.442695
        %v963 = vpow.pop %v962
        %v964 = vmul.f32 %v950, 1.442695
        %v965 = vpow.pop %v964
        %v966 = vmul.f32 %v951, 1.442695
        %v967 = vpow.pop %v966
        %v968 = vsel %vm919, %v953, 0.0
        %969 = vadd.xlane.f32.xlu0 %v968
        %v970 = vpop.xlane.xlu0 %969
        %v971 = vsel %vm919, %v955, 0.0
        %972 = vadd.xlane.f32.xlu0 %v971
        %v973 = vpop.xlane.xlu0 %972
        %v974 = vsel %vm919, %v957, 0.0
        %975 = vadd.xlane.f32.xlu0 %v974
        %v976 = vpop.xlane.xlu0 %975
        %v977 = vsel %vm919, %v959, 0.0
        %978 = vadd.xlane.f32.xlu0 %v977
        %v979 = vpop.xlane.xlu0 %978
        %v980 = vsel %vm919, %v961, 0.0
        %981 = vadd.xlane.f32.xlu0 %v980
        %v982 = vpop.xlane.xlu0 %981
        %v983 = vsel %vm919, %v963, 0.0
        %984 = vadd.xlane.f32.xlu0 %v983
        %v985 = vpop.xlane.xlu0 %984
        %v986 = vsel %vm919, %v965, 0.0
        %987 = vadd.xlane.f32.xlu0 %v986
        %v988 = vpop.xlane.xlu0 %987
        %v989 = vsel %vm919, %v967, 0.0
        %990 = vadd.xlane.f32.xlu0 %v989
        %v991 = vpop.xlane.xlu0 %990
        %v992 = vrcp.pop %v970
        %v993 = vrcp.pop %v973
        %v994 = vrcp.pop %v976
        %v995 = vrcp.pop %v979
        %v996 = vrcp.pop %v982
        %v997 = vrcp.pop %v985
        %v998 = vrcp.pop %v988
        %v999 = vrcp.pop %v991
        %v1000 = vmul.f32 %v953, %v992
        %v1001 = vmul.f32 %v955, %v993
        %v1002 = vmul.f32 %v957, %v994
        %v1003 = vmul.f32 %v959, %v995
        %v1004 = vmul.f32 %v961, %v996
        %v1005 = vmul.f32 %v963, %v997
        %v1006 = vmul.f32 %v965, %v998
        %v1007 = vmul.f32 %v967, %v999
        %v1008 = vpack.c.bf16 %v1001, %v1000
        %v1009 = vpack.c.bf16 %v1003, %v1002
        %v1010 = vpack.c.bf16 %v1005, %v1004
        %v1011 = vpack.c.bf16 %v1007, %v1006
        %v1013 = vsel %vm919, %v1008, 0
        %1015 = vmatprep.subr.bf16.mxu0 0
        %1016 = vmatpush1.bf16.msra.mxu0 %v715
        %1017 = vmatprep.subr.bf16.mxu0 0
        %1018 = vmatpush1.bf16.msra.mxu0 0
        %1019 = vmatprep.subr.bf16.mxu0 0
        %1020 = vmatpush1.bf16.msra.mxu0 0
        %1021 = vmatprep.subr.bf16.mxu0 0
        %1022 = vmatpush1.bf16.msra.mxu0 0
        %1023 = vmatprep.subr.bf16.mxu0 0
        %1024 = vmatpush1.bf16.msra.mxu0 0
        %1025 = vmatprep.subr.bf16.mxu0 0
        %1026 = vmatpush1.bf16.msra.mxu0 0
        %1027 = vmatprep.subr.bf16.mxu0 0
        %1028 = vmatpush1.bf16.msra.mxu0 0
        %1029 = vmatprep.subr.bf16.mxu0 0
        %1030 = vmatpush1.bf16.msra.mxu0 0
        %1031 = vmatprep.subr.bf16.mxu0 0
        %1032 = vmatpush1.bf16.msra.mxu0 0
        %1033 = vmatprep.subr.bf16.mxu0 0
        %1034 = vmatpush1.bf16.msra.mxu0 0
        %1035 = vmatprep.subr.bf16.mxu0 0
        %1036 = vmatpush1.bf16.msra.mxu0 0
        %1037 = vmatprep.subr.bf16.mxu0 0
        %1038 = vmatpush1.bf16.msra.mxu0 0
        %1039 = vmatprep.subr.bf16.mxu0 0
        %1040 = vmatpush1.bf16.msra.mxu0 0
        %1041 = vmatprep.subr.bf16.mxu0 0
        %1042 = vmatpush1.bf16.msra.mxu0 0
        %1043 = vmatprep.subr.bf16.mxu0 0
        %1044 = vmatpush1.bf16.msra.mxu0 0
        %1045 = vmatprep.subr.bf16.mxu0 0
        %1046 = vmatpush1.bf16.msra.mxu0 0
        %1047 = vmatprep.mubr.bf16.mxu0 0
        %1048 = vmatmul.mubr.bf16.gmra.mrb[0].mxu0 %v1013
        %v1049 = vpop.f32.mrb[0].mxu0
        %v1050 = vadd.f32 0.0, %v1049
        %v1051 = vpop.f32.mrb[0].mxu0
        %v1052 = vpop.f32.mrb[0].mxu0
        %v1053 = vadd.f32 0.0, %v1052
        %v1054 = vpop.f32.mrb[0].mxu0
        %1055 = vdwg.mxu0
        %1057 = vrot.lane.b32.xlu0 %v715, 120
        %v1058 = vpop.permute.xlu0 %1057
        %v1061 = vsel %vm919, %v1009, 0
        %1063 = vmatprep.subr.bf16.mxu0 0
        %1064 = vmatpush1.bf16.msra.mxu0 %v1058
        %1065 = vmatprep.subr.bf16.mxu0 0
        %1066 = vmatpush1.bf16.msra.mxu0 0
        %1067 = vmatprep.subr.bf16.mxu0 0
        %1068 = vmatpush1.bf16.msra.mxu0 0
        %1069 = vmatprep.subr.bf16.mxu0 0
        %1070 = vmatpush1.bf16.msra.mxu0 0
        %1071 = vmatprep.subr.bf16.mxu0 0
        %1072 = vmatpush1.bf16.msra.mxu0 0
        %1073 = vmatprep.subr.bf16.mxu0 0
        %1074 = vmatpush1.bf16.msra.mxu0 0
        %1075 = vmatprep.subr.bf16.mxu0 0
        %1076 = vmatpush1.bf16.msra.mxu0 0
        %1077 = vmatprep.subr.bf16.mxu0 0
        %1078 = vmatpush1.bf16.msra.mxu0 0
        %1079 = vmatprep.subr.bf16.mxu0 0
        %1080 = vmatpush1.bf16.msra.mxu0 0
        %1081 = vmatprep.subr.bf16.mxu0 0
        %1082 = vmatpush1.bf16.msra.mxu0 0
        %1083 = vmatprep.subr.bf16.mxu0 0
        %1084 = vmatpush1.bf16.msra.mxu0 0
        %1085 = vmatprep.subr.bf16.mxu0 0
        %1086 = vmatpush1.bf16.msra.mxu0 0
        %1087 = vmatprep.subr.bf16.mxu0 0
        %1088 = vmatpush1.bf16.msra.mxu0 0
        %1089 = vmatprep.subr.bf16.mxu0 0
        %1090 = vmatpush1.bf16.msra.mxu0 0
        %1091 = vmatprep.subr.bf16.mxu0 0
        %1092 = vmatpush1.bf16.msra.mxu0 0
        %1093 = vmatprep.subr.bf16.mxu0 0
        %1094 = vmatpush1.bf16.msra.mxu0 0
        %1095 = vmatprep.mubr.bf16.mxu0 0
        %1096 = vmatmul.mubr.bf16.gmra.mrb[0].mxu0 %v1061
        %v1097 = vpop.f32.mrb[0].mxu0
        %v1098 = vadd.f32 0.0, %v1097
        %v1099 = vpop.f32.mrb[0].mxu0
        %v1100 = vpop.f32.mrb[0].mxu0
        %v1101 = vadd.f32 0.0, %v1100
        %v1102 = vpop.f32.mrb[0].mxu0
        %1103 = vdwg.mxu0
        %1104 = vrot.lane.b32.xlu0 %v715, 112
        %v1105 = vpop.permute.xlu0 %1104
        %v1108 = vsel %vm919, %v1010, 0
        %1110 = vmatprep.subr.bf16.mxu0 0
        %1111 = vmatpush1.bf16.msra.mxu0 %v1105
        %1112 = vmatprep.subr.bf16.mxu0 0
        %1113 = vmatpush1.bf16.msra.mxu0 0
        %1114 = vmatprep.subr.bf16.mxu0 0
        %1115 = vmatpush1.bf16.msra.mxu0 0
        %1116 = vmatprep.subr.bf16.mxu0 0
        %1117 = vmatpush1.bf16.msra.mxu0 0
        %1118 = vmatprep.subr.bf16.mxu0 0
        %1119 = vmatpush1.bf16.msra.mxu0 0
        %1120 = vmatprep.subr.bf16.mxu0 0
        %1121 = vmatpush1.bf16.msra.mxu0 0
        %1122 = vmatprep.subr.bf16.mxu0 0
        %1123 = vmatpush1.bf16.msra.mxu0 0
        %1124 = vmatprep.subr.bf16.mxu0 0
        %1125 = vmatpush1.bf16.msra.mxu0 0
        %1126 = vmatprep.subr.bf16.mxu0 0
        %1127 = vmatpush1.bf16.msra.mxu0 0
        %1128 = vmatprep.subr.bf16.mxu0 0
        %1129 = vmatpush1.bf16.msra.mxu0 0
        %1130 = vmatprep.subr.bf16.mxu0 0
        %1131 = vmatpush1.bf16.msra.mxu0 0
        %1132 = vmatprep.subr.bf16.mxu0 0
        %1133 = vmatpush1.bf16.msra.mxu0 0
        %1134 = vmatprep.subr.bf16.mxu0 0
        %1135 = vmatpush1.bf16.msra.mxu0 0
        %1136 = vmatprep.subr.bf16.mxu0 0
        %1137 = vmatpush1.bf16.msra.mxu0 0
        %1138 = vmatprep.subr.bf16.mxu0 0
        %1139 = vmatpush1.bf16.msra.mxu0 0
        %1140 = vmatprep.subr.bf16.mxu0 0
        %1141 = vmatpush1.bf16.msra.mxu0 0
        %1142 = vmatprep.mubr.bf16.mxu0 0
        %1143 = vmatmul.mubr.bf16.gmra.mrb[0].mxu0 %v1108
        %v1144 = vpop.f32.mrb[0].mxu0
        %v1145 = vadd.f32 0.0, %v1144
        %v1146 = vpop.f32.mrb[0].mxu0
        %v1147 = vpop.f32.mrb[0].mxu0
        %v1148 = vadd.f32 0.0, %v1147
        %v1149 = vpop.f32.mrb[0].mxu0
        %1150 = vdwg.mxu0
        %1151 = vrot.lane.b32.xlu0 %v715, 104
        %v1152 = vpop.permute.xlu0 %1151
        %v1155 = vsel %vm919, %v1011, 0
        %1157 = vmatprep.subr.bf16.mxu0 0
        %1158 = vmatpush1.bf16.msra.mxu0 %v1152
        %1159 = vmatprep.subr.bf16.mxu0 0
        %1160 = vmatpush1.bf16.msra.mxu0 0
        %1161 = vmatprep.subr.bf16.mxu0 0
        %1162 = vmatpush1.bf16.msra.mxu0 0
        %1163 = vmatprep.subr.bf16.mxu0 0
        %1164 = vmatpush1.bf16.msra.mxu0 0
        %1165 = vmatprep.subr.bf16.mxu0 0
        %1166 = vmatpush1.bf16.msra.mxu0 0
        %1167 = vmatprep.subr.bf16.mxu0 0
        %1168 = vmatpush1.bf16.msra.mxu0 0
        %1169 = vmatprep.subr.bf16.mxu0 0
        %1170 = vmatpush1.bf16.msra.mxu0 0
        %1171 = vmatprep.subr.bf16.mxu0 0
        %1172 = vmatpush1.bf16.msra.mxu0 0
        %1173 = vmatprep.subr.bf16.mxu0 0
        %1174 = vmatpush1.bf16.msra.mxu0 0
        %1175 = vmatprep.subr.bf16.mxu0 0
        %1176 = vmatpush1.bf16.msra.mxu0 0
        %1177 = vmatprep.subr.bf16.mxu0 0
        %1178 = vmatpush1.bf16.msra.mxu0 0
        %1179 = vmatprep.subr.bf16.mxu0 0
        %1180 = vmatpush1.bf16.msra.mxu0 0
        %1181 = vmatprep.subr.bf16.mxu0 0
        %1182 = vmatpush1.bf16.msra.mxu0 0
        %1183 = vmatprep.subr.bf16.mxu0 0
        %1184 = vmatpush1.bf16.msra.mxu0 0
        %1185 = vmatprep.subr.bf16.mxu0 0
        %1186 = vmatpush1.bf16.msra.mxu0 0
        %1187 = vmatprep.subr.bf16.mxu0 0
        %1188 = vmatpush1.bf16.msra.mxu0 0
        %1189 = vmatprep.mubr.bf16.mxu0 0
        %1190 = vmatmul.mubr.bf16.gmra.mrb[0].mxu0 %v1155
        %v1191 = vpop.f32.mrb[0].mxu0
        %v1192 = vadd.f32 0.0, %v1191
        %v1193 = vpop.f32.mrb[0].mxu0
        %v1194 = vpop.f32.mrb[0].mxu0
        %v1195 = vadd.f32 0.0, %v1194
        %v1196 = vpop.f32.mrb[0].mxu0
        %1197 = vdwg.mxu0
        %1200 = vrot.lane.b32.xlu0 %v1098, 8
        %v1201 = vpop.permute.xlu0 %1200
        %1202 = vrot.lane.b32.xlu0 %v1101, 8
        %v1203 = vpop.permute.xlu0 %1202
        %1208 = vrot.lane.b32.xlu0 %v1145, 16
        %v1209 = vpop.permute.xlu0 %1208
        %1210 = vrot.lane.b32.xlu0 %v1148, 16
        %v1211 = vpop.permute.xlu0 %1210
        %1216 = vrot.lane.b32.xlu0 %v1192, 24
        %v1217 = vpop.permute.xlu0 %1216
        %1218 = vrot.lane.b32.xlu0 %v1195, 24
        %v1219 = vpop.permute.xlu0 %1218
        %v1222 = vsel %vm716, %v1050, %v1201
        %v1223 = vsel %vm716, %v1053, %v1203
        %v1224 = vsel %vm919, %v1222, %v1209
        %v1225 = vsel %vm919, %v1223, %v1211
        %vm1226 = vcmask 195584
        %v1227 = vsel %vm1226, %v1224, %v1217
        %v1228 = vsel %vm1226, %v1225, %v1219
        %v1229 = vpack.c.bf16 %v1228, %v1227
        %v1230 = vld [vmem:[%s6] sm:$0xf]
        %v1231 = vld [vmem:[%s6 + $0x4] sm:$0xf]
        %v1232 = vld [vmem:[%s6 + $0x8] sm:$0xf]
        %v1233 = vld [vmem:[%s6 + $0xc] sm:$0xf]
        %v1234 = vld [vmem:[%s7] sm:$0x1]
        %v1236 = vlaneseq
        %v1237 = vshrl.u32 %v1236, 7
        %v1238 = vsub.s32 0, %v1237
        %v1239 = vrot.slane %v1234, %v1238
        %v1245 = vunpack.c.l.b16 %v1230
        %v1246 = vunpack.c.l.b16 %v1231
        %v1247 = vunpack.c.l.b16 %v1232
        %v1248 = vunpack.c.l.b16 %v1233
        %v1249 = vpack.c.b16 %v1246, %v1245
        %v1250 = vpack.c.b16 %v1248, %v1247
        %v1254 = vsel %vm547, %v1229, 0
        %1256 = vmatprep.subr.bf16.mxu0 0
        %1257 = vmatpush1.bf16.msra.mxu0 %v1249
        %1258 = vmatprep.subr.bf16.mxu0 0
        %1259 = vmatpush1.bf16.msra.mxu0 %v1250
        %1260 = vmatprep.subr.bf16.mxu0 0
        %1261 = vmatpush1.bf16.msra.mxu0 0
        %1262 = vmatprep.subr.bf16.mxu0 0
        %1263 = vmatpush1.bf16.msra.mxu0 0
        %1264 = vmatprep.subr.bf16.mxu0 0
        %1265 = vmatpush1.bf16.msra.mxu0 0
        %1266 = vmatprep.subr.bf16.mxu0 0
        %1267 = vmatpush1.bf16.msra.mxu0 0
        %1268 = vmatprep.subr.bf16.mxu0 0
        %1269 = vmatpush1.bf16.msra.mxu0 0
        %1270 = vmatprep.subr.bf16.mxu0 0
        %1271 = vmatpush1.bf16.msra.mxu0 0
        %1272 = vmatprep.subr.bf16.mxu0 0
        %1273 = vmatpush1.bf16.msra.mxu0 0
        %1274 = vmatprep.subr.bf16.mxu0 0
        %1275 = vmatpush1.bf16.msra.mxu0 0
        %1276 = vmatprep.subr.bf16.mxu0 0
        %1277 = vmatpush1.bf16.msra.mxu0 0
        %1278 = vmatprep.subr.bf16.mxu0 0
        %1279 = vmatpush1.bf16.msra.mxu0 0
        %1280 = vmatprep.subr.bf16.mxu0 0
        %1281 = vmatpush1.bf16.msra.mxu0 0
        %1282 = vmatprep.subr.bf16.mxu0 0
        %1283 = vmatpush1.bf16.msra.mxu0 0
        %1284 = vmatprep.subr.bf16.mxu0 0
        %1285 = vmatpush1.bf16.msra.mxu0 0
        %1286 = vmatprep.subr.bf16.mxu0 0
        %1287 = vmatpush1.bf16.msra.mxu0 0
        %1288 = vmatprep.mubr.bf16.mxu0 0
        %1289 = vmatmul.mubr.bf16.gmra.mrb[0].mxu0 %v1254
        %v1290 = vpop.f32.mrb[0].mxu0
        %v1291 = vadd.f32 %v1239, %v1290
        %v1292 = vpop.f32.mrb[0].mxu0
        %v1293 = vpop.f32.mrb[0].mxu0
        %v1294 = vadd.f32 %v1239, %v1293
        %v1295 = vpop.f32.mrb[0].mxu0
        %1296 = vdwg.mxu0
        %v1297 = vadd.f32 %v521, %v1291
        %v1298 = vadd.f32 %v522, %v1294
        %v1299 = vld [vmem:[%s8] sm:$0x1]
        %v1300 = vld [vmem:[%s9] sm:$0x1]
        %v1301 = vsel %vm547, %v1297, 0.0
        %1302 = vadd.xlane.f32.xlu0 %v1301
        %v1303 = vpop.xlane.xlu0 %1302
        %v1304 = vsel %vm547, %v1298, 0.0
        %1305 = vadd.xlane.f32.xlu0 %v1304
        %v1306 = vpop.xlane.xlu0 %1305
        %v1307 = vrcp.pop 32.0
        %v1308 = vmul.f32 %v1303, %v1307
        %v1309 = vmul.f32 %v1306, %v1307
        %v1310 = vsub.f32 %v1297, %v1308
        %v1311 = vsub.f32 %v1298, %v1309
        %v1312 = vmul.f32 %v1310, %v1310
        %v1313 = vmul.f32 %v1311, %v1311
        %v1314 = vsel %vm547, %v1312, 0.0
        %1315 = vadd.xlane.f32.xlu0 %v1314
        %v1316 = vpop.xlane.xlu0 %1315
        %v1317 = vsel %vm547, %v1313, 0.0
        %1318 = vadd.xlane.f32.xlu0 %v1317
        %v1319 = vpop.xlane.xlu0 %1318
        %v1320 = vmul.f32 %v1316, %v1307
        %v1321 = vmul.f32 %v1319, %v1307
        %v1322 = vadd.f32 %v1320, 1e-05
        %v1323 = vadd.f32 %v1321, 1e-05
        %v1324 = vrsqrt.pop %v1322
        %v1325 = vrsqrt.pop %v1323
        %v1326 = vmul.f32 %v1310, %v1324
        %v1327 = vmul.f32 %v1311, %v1325
        %v1329 = vlaneseq
        %v1330 = vshrl.u32 %v1329, 7
        %v1331 = vsub.s32 0, %v1330
        %v1332 = vrot.slane %v1299, %v1331
        %v1334 = vmul.f32 %v1326, %v1332
        %v1335 = vmul.f32 %v1327, %v1332
        %v1337 = vlaneseq
        %v1338 = vshrl.u32 %v1337, 7
        %v1339 = vsub.s32 0, %v1338
        %v1340 = vrot.slane %v1300, %v1339
        %v1342 = vadd.f32 %v1334, %v1340
        %v1343 = vadd.f32 %v1335, %v1340
        %v1344 = vpack.c.bf16 %v1343, %v1342
        %v1345 = vld [vmem:[%s10] sm:$0xf]
        %v1346 = vld [vmem:[%s10 + $0x4] sm:$0xf]
        %v1347 = vld [vmem:[%s10 + $0x8] sm:$0xf]
        %v1348 = vld [vmem:[%s10 + $0xc] sm:$0xf]
        %v1349 = vld [vmem:[%s11] sm:$0x1]
        %v1351 = vlaneseq
        %v1352 = vshrl.u32 %v1351, 7
        %v1353 = vsub.s32 0, %v1352
        %v1354 = vrot.slane %v1349, %v1353
        %v1360 = vunpack.c.l.b16 %v1345
        %v1361 = vunpack.c.l.b16 %v1346
        %v1362 = vunpack.c.l.b16 %v1347
        %v1363 = vunpack.c.l.b16 %v1348
        %v1364 = vpack.c.b16 %v1361, %v1360
        %v1365 = vpack.c.b16 %v1363, %v1362
        %v1369 = vsel %vm547, %v1344, 0
        %1371 = vmatprep.subr.bf16.mxu0 0
        %1372 = vmatpush1.bf16.msra.mxu0 %v1364
        %1373 = vmatprep.subr.bf16.mxu0 0
        %1374 = vmatpush1.bf16.msra.mxu0 %v1365
        %1375 = vmatprep.subr.bf16.mxu0 0
        %1376 = vmatpush1.bf16.msra.mxu0 0
        %1377 = vmatprep.subr.bf16.mxu0 0
        %1378 = vmatpush1.bf16.msra.mxu0 0
        %1379 = vmatprep.subr.bf16.mxu0 0
        %1380 = vmatpush1.bf16.msra.mxu0 0
        %1381 = vmatprep.subr.bf16.mxu0 0
        %1382 = vmatpush1.bf16.msra.mxu0 0
        %1383 = vmatprep.subr.bf16.mxu0 0
        %1384 = vmatpush1.bf16.msra.mxu0 0
        %1385 = vmatprep.subr.bf16.mxu0 0
        %1386 = vmatpush1.bf16.msra.mxu0 0
        %1387 = vmatprep.subr.bf16.mxu0 0
        %1388 = vmatpush1.bf16.msra.mxu0 0
        %1389 = vmatprep.subr.bf16.mxu0 0
        %1390 = vmatpush1.bf16.msra.mxu0 0
        %1391 = vmatprep.subr.bf16.mxu0 0
        %1392 = vmatpush1.bf16.msra.mxu0 0
        %1393 = vmatprep.subr.bf16.mxu0 0
        %1394 = vmatpush1.bf16.msra.mxu0 0
        %1395 = vmatprep.subr.bf16.mxu0 0
        %1396 = vmatpush1.bf16.msra.mxu0 0
        %1397 = vmatprep.subr.bf16.mxu0 0
        %1398 = vmatpush1.bf16.msra.mxu0 0
        %1399 = vmatprep.subr.bf16.mxu0 0
        %1400 = vmatpush1.bf16.msra.mxu0 0
        %1401 = vmatprep.subr.bf16.mxu0 0
        %1402 = vmatpush1.bf16.msra.mxu0 0
        %1403 = vmatprep.mubr.bf16.mxu0 0
        %1404 = vmatmul.mubr.bf16.gmra.mrb[0].mxu0 %v1369
        %v1405 = vpop.f32.mrb[0].mxu0
        %v1406 = vadd.f32 %v1354, %v1405
        %v1407 = vpop.f32.mrb[0].mxu0
        %v1408 = vpop.f32.mrb[0].mxu0
        %v1409 = vadd.f32 %v1354, %v1408
        %v1410 = vpop.f32.mrb[0].mxu0
        %1411 = vdwg.mxu0
        %v1412 = vmax.f32 %v1406, 0.0
        %v1413 = vmax.f32 %v1409, 0.0
        %v1414 = vpack.c.bf16 %v1413, %v1412
        %v1415 = vld [vmem:[%s12] sm:$0xf]
        %v1416 = vld [vmem:[%s12 + $0x4] sm:$0xf]
        %v1417 = vld [vmem:[%s12 + $0x8] sm:$0xf]
        %v1418 = vld [vmem:[%s12 + $0xc] sm:$0xf]
        %v1419 = vld [vmem:[%s12 + $0x10] sm:$0xf]
        %v1420 = vld [vmem:[%s12 + $0x14] sm:$0xf]
        %v1421 = vld [vmem:[%s12 + $0x18] sm:$0xf]
        %v1422 = vld [vmem:[%s12 + $0x1c] sm:$0xf]
        %v1423 = vld [vmem:[%s13] sm:$0x1]
        %v1425 = vlaneseq
        %v1426 = vshrl.u32 %v1425, 7
        %v1427 = vsub.s32 0, %v1426
        %v1428 = vrot.slane %v1423, %v1427
        %v1438 = vunpack.c.l.b16 %v1415
        %v1439 = vunpack.c.l.b16 %v1416
        %v1440 = vunpack.c.l.b16 %v1417
        %v1441 = vunpack.c.l.b16 %v1418
        %v1442 = vunpack.c.l.b16 %v1419
        %v1443 = vunpack.c.l.b16 %v1420
        %v1444 = vunpack.c.l.b16 %v1421
        %v1445 = vunpack.c.l.b16 %v1422
        %v1446 = vpack.c.b16 %v1439, %v1438
        %v1447 = vpack.c.b16 %v1441, %v1440
        %v1448 = vpack.c.b16 %v1443, %v1442
        %v1449 = vpack.c.b16 %v1445, %v1444
        %vm1454 = vcmask 523264
        %v1456 = vsel %vm1454, %v1414, 0
        %1458 = vmatprep.subr.bf16.mxu0 0
        %1459 = vmatpush1.bf16.msra.mxu0 %v1446
        %1460 = vmatprep.subr.bf16.mxu0 0
        %1461 = vmatpush1.bf16.msra.mxu0 %v1447
        %1462 = vmatprep.subr.bf16.mxu0 0
        %1463 = vmatpush1.bf16.msra.mxu0 %v1448
        %1464 = vmatprep.subr.bf16.mxu0 0
        %1465 = vmatpush1.bf16.msra.mxu0 %v1449
        %1466 = vmatprep.subr.bf16.mxu0 0
        %1467 = vmatpush1.bf16.msra.mxu0 0
        %1468 = vmatprep.subr.bf16.mxu0 0
        %1469 = vmatpush1.bf16.msra.mxu0 0
        %1470 = vmatprep.subr.bf16.mxu0 0
        %1471 = vmatpush1.bf16.msra.mxu0 0
        %1472 = vmatprep.subr.bf16.mxu0 0
        %1473 = vmatpush1.bf16.msra.mxu0 0
        %1474 = vmatprep.subr.bf16.mxu0 0
        %1475 = vmatpush1.bf16.msra.mxu0 0
        %1476 = vmatprep.subr.bf16.mxu0 0
        %1477 = vmatpush1.bf16.msra.mxu0 0
        %1478 = vmatprep.subr.bf16.mxu0 0
        %1479 = vmatpush1.bf16.msra.mxu0 0
        %1480 = vmatprep.subr.bf16.mxu0 0
        %1481 = vmatpush1.bf16.msra.mxu0 0
        %1482 = vmatprep.subr.bf16.mxu0 0
        %1483 = vmatpush1.bf16.msra.mxu0 0
        %1484 = vmatprep.subr.bf16.mxu0 0
        %1485 = vmatpush1.bf16.msra.mxu0 0
        %1486 = vmatprep.subr.bf16.mxu0 0
        %1487 = vmatpush1.bf16.msra.mxu0 0
        %1488 = vmatprep.subr.bf16.mxu0 0
        %1489 = vmatpush1.bf16.msra.mxu0 0
        %1490 = vmatprep.mubr.bf16.mxu0 0
        %1491 = vmatmul.mubr.bf16.gmra.mrb[0].mxu0 %v1456
        %v1492 = vpop.f32.mrb[0].mxu0
        %v1493 = vadd.f32 %v1428, %v1492
        %v1494 = vpop.f32.mrb[0].mxu0
        %v1495 = vpop.f32.mrb[0].mxu0
        %v1496 = vadd.f32 %v1428, %v1495
        %v1497 = vpop.f32.mrb[0].mxu0
        %1498 = vdwg.mxu0
        %v1499 = vadd.f32 %v1342, %v1493
        %v1500 = vadd.f32 %v1343, %v1496
        %v1501 = vld [vmem:[%s14] sm:$0x1]
        %v1502 = vld [vmem:[%s15] sm:$0x1]
        %v1503 = vsel %vm547, %v1499, 0.0
        %1504 = vadd.xlane.f32.xlu0 %v1503
        %v1505 = vpop.xlane.xlu0 %1504
        %v1506 = vsel %vm547, %v1500, 0.0
        %1507 = vadd.xlane.f32.xlu0 %v1506
        %v1508 = vpop.xlane.xlu0 %1507
        %v1509 = vmul.f32 %v1505, %v1307
        %v1510 = vmul.f32 %v1508, %v1307
        %v1511 = vsub.f32 %v1499, %v1509
        %v1512 = vsub.f32 %v1500, %v1510
        %v1513 = vmul.f32 %v1511, %v1511
        %v1514 = vmul.f32 %v1512, %v1512
        %v1515 = vsel %vm547, %v1513, 0.0
        %1516 = vadd.xlane.f32.xlu0 %v1515
        %v1517 = vpop.xlane.xlu0 %1516
        %v1518 = vsel %vm547, %v1514, 0.0
        %1519 = vadd.xlane.f32.xlu0 %v1518
        %v1520 = vpop.xlane.xlu0 %1519
        %v1521 = vmul.f32 %v1517, %v1307
        %v1522 = vmul.f32 %v1520, %v1307
        %v1523 = vadd.f32 %v1521, 1e-05
        %v1524 = vadd.f32 %v1522, 1e-05
        %v1525 = vrsqrt.pop %v1523
        %v1526 = vrsqrt.pop %v1524
        %v1527 = vmul.f32 %v1511, %v1525
        %v1528 = vmul.f32 %v1512, %v1526
        %v1530 = vlaneseq
        %v1531 = vshrl.u32 %v1530, 7
        %v1532 = vsub.s32 0, %v1531
        %v1533 = vrot.slane %v1501, %v1532
        %v1535 = vmul.f32 %v1527, %v1533
        %v1536 = vmul.f32 %v1528, %v1533
        %v1538 = vlaneseq
        %v1539 = vshrl.u32 %v1538, 7
        %v1540 = vsub.s32 0, %v1539
        %v1541 = vrot.slane %v1502, %v1540
        %v1543 = vadd.f32 %v1535, %v1541
        %v1544 = vadd.f32 %v1536, %v1541
        %1545 = vst.msk [vmem:[%s514] sm:$0xff] %vm547, %v1543
        %1546 = vst.msk [vmem:[%s514 + $0x8] sm:$0xff] %vm547, %v1544
        %s1547 = sand.u32 %s379, 1
        %s1548 = scalar_lea.sflag [#allocation3], %s1547
        %s1549 = sand.u32 %s379, 1
        %s1550 = smul.addr %s1549, 16
        %s1551 = scalar_lea.vmem [#allocation2], %s1550
        // Predicated region
        $region85: #{swin_transformer_1d_block.1} parent=83 // pred_check
          %p1552 = pneg %p389
        $region86: #{swin_transformer_1d_block.1} parent=83 // pred_check_branch
          %1554 = sbr.rel (%p1552) target = $region88
        $region87: #{swin_transformer_1d_block.1} parent=83 // pred_region
          %s1556 = ssub.s32 256, 256
          %1557 = vsyncadd %s1548, %s1556
          %s1558 = smul.addr %s30, 2
          %s1559 = smul.addr %s1558, 128
          %s1560 = scalar_lea.hbm %s16, %s1559
          %s1561 = sshll.u32 %s1551, 4
          %s1562 = int_to_ptr.vmem [resolvable:$true] %s1561
          %1567 = dma.vmem_to_hbm [thread:$0]  %s1562, 256, %s1560, %s1548, 128, 128, 8
        $region88: #{swin_transformer_1d_block.1} parent=83 // pred_fallthru
          _
      $region84: #{swin_transformer_1d_block.1} parent=5 // pred_fallthru
        _
      %p1568 = scmp.le.s32.totalorder 2, %s25
      // Predicated region
      $region89: #{swin_transformer_1d_block.1} parent=5 // pred_check
        %p1569 = pneg %p1568
      $region90: #{swin_transformer_1d_block.1} parent=5 // pred_check_branch
        %1571 = sbr.rel (%p1569) target = $region92
      $region91: #{swin_transformer_1d_block.1} parent=5 // pred_region
        %s1572 = ssub.s32 %s25, 2
        // Predicated region
        $region93: #{swin_transformer_1d_block.1} parent=91 // pred_check
          %p1573 = pneg %p395
        $region94: #{swin_transformer_1d_block.1} parent=91 // pred_check_branch
          %1575 = sbr.rel (%p1573) target = $region96
        $region95: #{swin_transformer_1d_block.1} parent=91 // pred_region
          %s1576 = sand.u32 %s380, 1
          %s1577 = scalar_lea.sflag [#allocation3], %s1576
          %s1578 = sand.u32 %s380, 1
          %s1579 = smul.addr %s1578, 16
          %s1580 = scalar_lea.vmem [#allocation2], %s1579
          %1581 = dma.done %s1577, 256
        $region96: #{swin_transformer_1d_block.1} parent=91 // pred_fallthru
          _
      $region92: #{swin_transformer_1d_block.1} parent=5 // pred_fallthru
        _
    $region6: #{swin_transformer_1d_block.1} parent=1 // loop_footer
      %s29 = sadd.s32 1, %s25
    $region7: #{swin_transformer_1d_block.1} parent=1 // loop_footer_branch
      %24 = sbr.rel target = $region3
    $region8: #{swin_transformer_1d_block.1} parent=1 // loop_exit
      _
    %1582 = vsyncpa [#allocation3], 1
    %s1583 = scalar_lea.sflag [#allocation3], 1
    %1584 = vsyncpa %s1583, 1

</llo_original>
